<compile_context>
chip_gen: v6e
topology: v6e:2x2x1
jax: 0.10.0
libtpu: 0.0.40
codegen_flags: <defaults>
</compile_context>

<pallas_src>
import math

import jax
import jax.numpy as jnp
from jax.experimental import pallas as pl
from jax.experimental.pallas import tpu as pltpu

HID_DIM = 32
N_HEADS = 4
HEAD_DIM = HID_DIM // N_HEADS
PF_DIM = 64
INV_SCALE = 1.0 / math.sqrt(HEAD_DIM)
EPS = 1e-5  # nn.LayerNorm default


def _encoder_layer_kernel(src_ref, mask_ref, wqkv_ref, wo_ref, wl12_ref,
                          wf1_ref, wf2_ref, vec_ref, out_ref):
    """Whole (B*L, H) token slab in one invocation."""
    x = src_ref[...]              # (B*L, H)
    mask = mask_ref[...]          # (B, 1, L)
    B, L = mask.shape[0], mask.shape[2]
    M, H = x.shape[0], HID_DIM

    # ---- packed bias / LayerNorm slab (9, 96) ----
    vec = vec_ref[...]
    b_qkv = vec[0:1, :]                       # (1, 96) = [bq | bk | bv]
    b_o   = vec[1:2, :H]
    b_l12 = vec[2:3, :2 * H]                  # [bl1 | bl2]
    g1    = vec[3:4, :H]
    beta1 = vec[4:5, :H]
    b_f1  = vec[5:6, :PF_DIM]
    b_f2  = vec[6:7, :H]
    g2    = vec[7:8, :H]
    beta2 = vec[8:9, :H]

    # ---- fused Q/K/V projection: one (M,32)x(32,96) matmul ----
    qkv = jnp.dot(x, wqkv_ref[...], preferred_element_type=jnp.float32) + b_qkv

    def split_heads(off):
        # lane slice per head, stacked along a leading batch axis -> (NH*B, L, HD)
        return jnp.concatenate(
            [qkv[:, off + h * HEAD_DIM: off + (h + 1) * HEAD_DIM].reshape(B, L, HEAD_DIM)
             for h in range(N_HEADS)], axis=0)

    qh, kh, vh = split_heads(0), split_heads(H), split_heads(2 * H)

    # ---- attention: single batched einsum over all (head, batch) pairs ----
    energy = jnp.einsum("nqd,nkd->nqk", qh, kh,
                        preferred_element_type=jnp.float32) * INV_SCALE
    mask_b = jnp.broadcast_to(mask, (B, L, L))
    mask_bh = jnp.concatenate([mask_b] * N_HEADS, axis=0)       # (NH*B, L, L)
    energy = jnp.where(mask_bh == 0.0, -1e10, energy)
    energy = energy - jnp.max(energy, axis=-1, keepdims=True)   # stable softmax
    p = jnp.exp(energy)
    p = p * pl.reciprocal(jnp.sum(p, axis=-1, keepdims=True), approx=True)
    ctx = jnp.einsum("nqk,nkd->nqd", p, vh,
                     preferred_element_type=jnp.float32)        # (NH*B, L, HD)

    # concat heads back on the lane axis; single fc_o matmul
    o = jnp.concatenate([ctx[h * B:(h + 1) * B].reshape(M, HEAD_DIM)
                         for h in range(N_HEADS)], axis=1)      # (M, H)
    o = jnp.dot(o, wo_ref[...], preferred_element_type=jnp.float32) + b_o

    # ---- gating: [o, x] @ [wl1 | wl2] in one (M,64)x(64,64) matmul ----
    xcat = jnp.concatenate([o, x], axis=1)                      # (M, 2H)
    gl = jnp.dot(xcat, wl12_ref[...], preferred_element_type=jnp.float32) + b_l12
    _src = jax.nn.sigmoid(gl[:, :H]) * gl[:, H:]

    # ---- residual + self_attn_layer_norm (dropout = identity) ----
    y = x + _src
    mu = jnp.mean(y, axis=-1, keepdims=True)
    var = jnp.mean((y - mu) ** 2, axis=-1, keepdims=True)
    src_ln = (y - mu) * jax.lax.rsqrt(var + EPS) * g1 + beta1

    # ---- position-wise FFN: relu(fc_1) -> relu(fc_2) (both relus, per reference) ----
    h1 = jnp.maximum(
        jnp.dot(src_ln, wf1_ref[...], preferred_element_type=jnp.float32) + b_f1, 0.0)
    h2 = jnp.maximum(
        jnp.dot(h1, wf2_ref[...], preferred_element_type=jnp.float32) + b_f2, 0.0)

    # ---- residual + ff_layer_norm1 ----
    z = src_ln + h2
    mu2 = jnp.mean(z, axis=-1, keepdims=True)
    var2 = jnp.mean((z - mu2) ** 2, axis=-1, keepdims=True)
    out_ref[...] = (z - mu2) * jax.lax.rsqrt(var2 + EPS) * g2 + beta2


def _pack_params(params):
    """Fuse / pack the many tiny parameter tensors into 6 kernel inputs."""
    sa, ff = params["self_attention"], params["ff"]
    wqkv = jnp.concatenate([sa["wq"], sa["wk"], sa["wv"]], axis=1)   # (32, 96)
    wl12 = jnp.concatenate([sa["wl1"], sa["wl2"]], axis=1)           # (64, 64)

    def row(v, width=96):
        v = v.reshape(-1)
        return jnp.pad(v, (0, width - v.shape[0]))

    vec = jnp.stack([
        row(jnp.concatenate([sa["bq"], sa["bk"], sa["bv"]], axis=1)),
        row(sa["bo"]),
        row(jnp.concatenate([sa["bl1"], sa["bl2"]], axis=1)),
        row(params["ln_attn_g"]), row(params["ln_attn_b"]),
        row(ff["b1"]), row(ff["b2"]),
        row(params["ln_ff1_g"]), row(params["ln_ff1_b"]),
    ])                                                               # (9, 96)
    return wqkv, sa["wo"], wl12, ff["w1"], ff["w2"], vec


def encoder_layer_forward(src, src_mask, imgs, params):
    # TODO(synk): the multimodal branch (mean(imgs)/multimodel_attention/l2/tanh -> src3)
    # is dead code in the reference forward (src3 never feeds the returned src4), so it
    # is intentionally not computed.
    del imgs
    B, L, H = src.shape
    wqkv, wo, wl12, wf1, wf2, vec = _pack_params(params)
    src2d = src.reshape(B * L, H)

    vmem = pl.BlockSpec(memory_space=pltpu.MemorySpace.VMEM)
    out2d = pl.pallas_call(
        _encoder_layer_kernel,
        out_shape=jax.ShapeDtypeStruct((B * L, H), jnp.float32),
        in_specs=[vmem] * 8,
        out_specs=vmem,
    )(src2d, src_mask, wqkv, wo, wl12, wf1, wf2, vec)
    return out2d.reshape(B, L, H)


def init_params(key):
    kit = iter(jax.random.split(key, 32))

    def linear(in_f, out_f):
        bound = 1.0 / math.sqrt(in_f)
        w = jax.random.uniform(next(kit), (in_f, out_f), jnp.float32, -bound, bound)
        b = jax.random.uniform(next(kit), (1, out_f), jnp.float32, -bound, bound)
        return w, b

    sa = {}
    for nm, i, o in [("q", HID_DIM, HID_DIM), ("k", HID_DIM, HID_DIM),
                     ("v", HID_DIM, HID_DIM), ("o", HID_DIM, HID_DIM),
                     ("l1", 2 * HID_DIM, HID_DIM), ("l2", 2 * HID_DIM, HID_DIM)]:
        w, b = linear(i, o)
        sa["w" + nm], sa["b" + nm] = w, b

    w1, b1 = linear(HID_DIM, PF_DIM)
    w2, b2 = linear(PF_DIM, HID_DIM)

    return {
        "self_attention": sa,
        "ff": {"w1": w1, "b1": b1, "w2": w2, "b2": b2},
        "ln_attn_g": jnp.ones((1, HID_DIM), jnp.float32),   # self_attn_layer_norm
        "ln_attn_b": jnp.zeros((1, HID_DIM), jnp.float32),
        "ln_ff1_g": jnp.ones((1, HID_DIM), jnp.float32),    # ff_layer_norm1
        "ln_ff1_b": jnp.zeros((1, HID_DIM), jnp.float32),
    }


if __name__ == "__main__":
    B, L, N_IMG = 2, 8, 6
    key = jax.random.PRNGKey(0)
    k_src, k_img, k_par = jax.random.split(key, 3)

    src = jax.random.normal(k_src, (B, L, HID_DIM), jnp.float32)
    imgs = jax.random.normal(k_img, (B, N_IMG, HID_DIM), jnp.float32)
    src_mask = jnp.ones((B, 1, L), jnp.float32)
    src_mask = src_mask.at[1, 0, 6:].set(0.0)   # pad out last 2 positions of batch 1

    params = init_params(k_par)
    out = encoder_layer_forward(src, src_mask, imgs, params)
    out = jax.block_until_ready(out)
    assert out.shape == (B, L, HID_DIM) and out.dtype == jnp.float32
    assert bool(jnp.all(jnp.isfinite(out)))
    print("KERNEL_OK")
</pallas_src>

<mosaic_0001>
module attributes {stable_mosaic.version = 11 : i64} {
  func.func @_encoder_layer_kernel(%arg0: memref<16x32xf32, #tpu.memory_space<vmem>>, %arg1: memref<2x1x8xf32, #tpu.memory_space<vmem>>, %arg2: memref<32x96xf32, #tpu.memory_space<vmem>>, %arg3: memref<32x32xf32, #tpu.memory_space<vmem>>, %arg4: memref<64x64xf32, #tpu.memory_space<vmem>>, %arg5: memref<32x64xf32, #tpu.memory_space<vmem>>, %arg6: memref<64x32xf32, #tpu.memory_space<vmem>>, %arg7: memref<9x96xf32, #tpu.memory_space<vmem>>, %arg8: memref<16x32xf32, #tpu.memory_space<vmem>>) attributes {dimension_semantics = [], scalar_prefetch = 0 : i64, scratch_operands = 0 : i64, tpu.core_type = #tpu.core_type<tc>} {
    %c0 = arith.constant 0 : index
    %c0_0 = arith.constant 0 : index
    %0 = vector.load %arg0[%c0, %c0_0] : memref<16x32xf32, #tpu.memory_space<vmem>>, vector<16x32xf32>
    %c0_1 = arith.constant 0 : index
    %c0_2 = arith.constant 0 : index
    %c0_3 = arith.constant 0 : index
    %1 = vector.load %arg1[%c0_1, %c0_2, %c0_3] : memref<2x1x8xf32, #tpu.memory_space<vmem>>, vector<2x1x8xf32>
    %c0_4 = arith.constant 0 : index
    %c0_5 = arith.constant 0 : index
    %2 = vector.load %arg7[%c0_4, %c0_5] : memref<9x96xf32, #tpu.memory_space<vmem>>, vector<9x96xf32>
    %3 = vector.extract_strided_slice %2 {offsets = [0, 0], sizes = [1, 96], strides = [1, 1]} : vector<9x96xf32> to vector<1x96xf32>
    %4 = vector.extract_strided_slice %2 {offsets = [1, 0], sizes = [1, 32], strides = [1, 1]} : vector<9x96xf32> to vector<1x32xf32>
    %5 = vector.extract_strided_slice %2 {offsets = [2, 0], sizes = [1, 64], strides = [1, 1]} : vector<9x96xf32> to vector<1x64xf32>
    %6 = vector.extract_strided_slice %2 {offsets = [3, 0], sizes = [1, 32], strides = [1, 1]} : vector<9x96xf32> to vector<1x32xf32>
    %7 = vector.extract_strided_slice %2 {offsets = [4, 0], sizes = [1, 32], strides = [1, 1]} : vector<9x96xf32> to vector<1x32xf32>
    %8 = vector.extract_strided_slice %2 {offsets = [5, 0], sizes = [1, 64], strides = [1, 1]} : vector<9x96xf32> to vector<1x64xf32>
    %9 = vector.extract_strided_slice %2 {offsets = [6, 0], sizes = [1, 32], strides = [1, 1]} : vector<9x96xf32> to vector<1x32xf32>
    %10 = vector.extract_strided_slice %2 {offsets = [7, 0], sizes = [1, 32], strides = [1, 1]} : vector<9x96xf32> to vector<1x32xf32>
    %11 = vector.extract_strided_slice %2 {offsets = [8, 0], sizes = [1, 32], strides = [1, 1]} : vector<9x96xf32> to vector<1x32xf32>
    %c0_6 = arith.constant 0 : index
    %c0_7 = arith.constant 0 : index
    %12 = vector.load %arg2[%c0_6, %c0_7] : memref<32x96xf32, #tpu.memory_space<vmem>>, vector<32x96xf32>
    %cst = arith.constant dense<0.000000e+00> : vector<16x96xf32>
    %13 = tpu.matmul %0, %12, %cst {dimension_numbers = #tpu.dot_dimension_numbers<[1], [0], [0], [1], [0, 0, 1, 1], [], []>} : vector<16x32xf32>, vector<32x96xf32>, vector<16x96xf32> -> vector<16x96xf32>
    %14 = vector.broadcast %3 : vector<1x96xf32> to vector<16x96xf32>
    %15 = arith.addf %13, %14 : vector<16x96xf32>
    %16 = vector.extract_strided_slice %15 {offsets = [0, 0], sizes = [16, 8], strides = [1, 1]} : vector<16x96xf32> to vector<16x8xf32>
    %17 = vector.shape_cast %16 : vector<16x8xf32> to vector<2x8x8xf32>
    %18 = vector.extract_strided_slice %15 {offsets = [0, 8], sizes = [16, 8], strides = [1, 1]} : vector<16x96xf32> to vector<16x8xf32>
    %19 = vector.shape_cast %18 : vector<16x8xf32> to vector<2x8x8xf32>
    %20 = vector.extract_strided_slice %15 {offsets = [0, 16], sizes = [16, 8], strides = [1, 1]} : vector<16x96xf32> to vector<16x8xf32>
    %21 = vector.shape_cast %20 : vector<16x8xf32> to vector<2x8x8xf32>
    %22 = vector.extract_strided_slice %15 {offsets = [0, 24], sizes = [16, 8], strides = [1, 1]} : vector<16x96xf32> to vector<16x8xf32>
    %23 = vector.shape_cast %22 : vector<16x8xf32> to vector<2x8x8xf32>
    %24 = tpu.concatenate %17, %19, %21, %23 in 0 : vector<2x8x8xf32>, vector<2x8x8xf32>, vector<2x8x8xf32>, vector<2x8x8xf32> -> vector<8x8x8xf32>
    %25 = vector.extract_strided_slice %15 {offsets = [0, 32], sizes = [16, 8], strides = [1, 1]} : vector<16x96xf32> to vector<16x8xf32>
    %26 = vector.shape_cast %25 : vector<16x8xf32> to vector<2x8x8xf32>
    %27 = vector.extract_strided_slice %15 {offsets = [0, 40], sizes = [16, 8], strides = [1, 1]} : vector<16x96xf32> to vector<16x8xf32>
    %28 = vector.shape_cast %27 : vector<16x8xf32> to vector<2x8x8xf32>
    %29 = vector.extract_strided_slice %15 {offsets = [0, 48], sizes = [16, 8], strides = [1, 1]} : vector<16x96xf32> to vector<16x8xf32>
    %30 = vector.shape_cast %29 : vector<16x8xf32> to vector<2x8x8xf32>
    %31 = vector.extract_strided_slice %15 {offsets = [0, 56], sizes = [16, 8], strides = [1, 1]} : vector<16x96xf32> to vector<16x8xf32>
    %32 = vector.shape_cast %31 : vector<16x8xf32> to vector<2x8x8xf32>
    %33 = tpu.concatenate %26, %28, %30, %32 in 0 : vector<2x8x8xf32>, vector<2x8x8xf32>, vector<2x8x8xf32>, vector<2x8x8xf32> -> vector<8x8x8xf32>
    %34 = vector.extract_strided_slice %15 {offsets = [0, 64], sizes = [16, 8], strides = [1, 1]} : vector<16x96xf32> to vector<16x8xf32>
    %35 = vector.shape_cast %34 : vector<16x8xf32> to vector<2x8x8xf32>
    %36 = vector.extract_strided_slice %15 {offsets = [0, 72], sizes = [16, 8], strides = [1, 1]} : vector<16x96xf32> to vector<16x8xf32>
    %37 = vector.shape_cast %36 : vector<16x8xf32> to vector<2x8x8xf32>
    %38 = vector.extract_strided_slice %15 {offsets = [0, 80], sizes = [16, 8], strides = [1, 1]} : vector<16x96xf32> to vector<16x8xf32>
    %39 = vector.shape_cast %38 : vector<16x8xf32> to vector<2x8x8xf32>
    %40 = vector.extract_strided_slice %15 {offsets = [0, 88], sizes = [16, 8], strides = [1, 1]} : vector<16x96xf32> to vector<16x8xf32>
    %41 = vector.shape_cast %40 : vector<16x8xf32> to vector<2x8x8xf32>
    %42 = tpu.concatenate %35, %37, %39, %41 in 0 : vector<2x8x8xf32>, vector<2x8x8xf32>, vector<2x8x8xf32>, vector<2x8x8xf32> -> vector<8x8x8xf32>
    "tpu.trace_start"() <{level = 10 : i32, message = "nqd,nkd->nqk"}> : () -> ()
    %cst_8 = arith.constant dense<0.000000e+00> : vector<8x8x8xf32>
    %43 = tpu.matmul %24, %33, %cst_8 {dimension_numbers = #tpu.dot_dimension_numbers<[2], [2], [1], [1], [0, 0, 0, 1, 1, 1], [0], [0]>} : vector<8x8x8xf32>, vector<8x8x8xf32>, vector<8x8x8xf32> -> vector<8x8x8xf32>
    "tpu.trace_stop"() : () -> ()
    %cst_9 = arith.constant 0.353553385 : f32
    %44 = vector.broadcast %cst_9 : f32 to vector<8x8x8xf32>
    %45 = arith.mulf %43, %44 : vector<8x8x8xf32>
    %46 = vector.shape_cast %1 : vector<2x1x8xf32> to vector<2x1x8xf32>
    %47 = vector.broadcast %46 : vector<2x1x8xf32> to vector<2x8x8xf32>
    %48 = tpu.concatenate %47, %47, %47, %47 in 0 : vector<2x8x8xf32>, vector<2x8x8xf32>, vector<2x8x8xf32>, vector<2x8x8xf32> -> vector<8x8x8xf32>
    %cst_10 = arith.constant 0.000000e+00 : f32
    %49 = vector.broadcast %cst_10 : f32 to vector<8x8x8xf32>
    %50 = arith.cmpf oeq, %48, %49 : vector<8x8x8xf32>
    %cst_11 = arith.constant -1.000000e+10 : f32
    %51 = vector.broadcast %cst_11 : f32 to vector<8x8x8xf32>
    %52 = arith.select %50, %51, %45 : vector<8x8x8xi1>, vector<8x8x8xf32>
    %cst_12 = arith.constant dense<0xFF800000> : vector<8x8xf32>
    %53 = vector.multi_reduction <maximumf>, %52, %cst_12 [2] : vector<8x8x8xf32> to vector<8x8xf32>
    %54 = vector.shape_cast %53 : vector<8x8xf32> to vector<8x8x1xf32>
    %55 = vector.broadcast %54 : vector<8x8x1xf32> to vector<8x8x8xf32>
    %56 = arith.subf %52, %55 : vector<8x8x8xf32>
    %57 = math.exp %56 : vector<8x8x8xf32>
    %cst_13 = arith.constant dense<0.000000e+00> : vector<8x8xf32>
    %58 = vector.multi_reduction <add>, %57, %cst_13 [2] : vector<8x8x8xf32> to vector<8x8xf32>
    %59 = vector.shape_cast %58 : vector<8x8xf32> to vector<8x8x1xf32>
    %60 = tpu.reciprocal %59 {approx = true} : vector<8x8x1xf32> -> vector<8x8x1xf32>
    %61 = vector.broadcast %60 : vector<8x8x1xf32> to vector<8x8x8xf32>
    %62 = arith.mulf %57, %61 : vector<8x8x8xf32>
    "tpu.trace_start"() <{level = 10 : i32, message = "nqk,nkd->nqd"}> : () -> ()
    %cst_14 = arith.constant dense<0.000000e+00> : vector<8x8x8xf32>
    %63 = tpu.matmul %62, %42, %cst_14 {dimension_numbers = #tpu.dot_dimension_numbers<[2], [1], [1], [2], [0, 0, 0, 1, 1, 2], [0], [0]>} : vector<8x8x8xf32>, vector<8x8x8xf32>, vector<8x8x8xf32> -> vector<8x8x8xf32>
    "tpu.trace_stop"() : () -> ()
    %64 = vector.extract_strided_slice %63 {offsets = [0, 0, 0], sizes = [2, 8, 8], strides = [1, 1, 1]} : vector<8x8x8xf32> to vector<2x8x8xf32>
    %65 = vector.shape_cast %64 : vector<2x8x8xf32> to vector<16x8xf32>
    %66 = vector.extract_strided_slice %63 {offsets = [2, 0, 0], sizes = [2, 8, 8], strides = [1, 1, 1]} : vector<8x8x8xf32> to vector<2x8x8xf32>
    %67 = vector.shape_cast %66 : vector<2x8x8xf32> to vector<16x8xf32>
    %68 = vector.extract_strided_slice %63 {offsets = [4, 0, 0], sizes = [2, 8, 8], strides = [1, 1, 1]} : vector<8x8x8xf32> to vector<2x8x8xf32>
    %69 = vector.shape_cast %68 : vector<2x8x8xf32> to vector<16x8xf32>
    %70 = vector.extract_strided_slice %63 {offsets = [6, 0, 0], sizes = [2, 8, 8], strides = [1, 1, 1]} : vector<8x8x8xf32> to vector<2x8x8xf32>
    %71 = vector.shape_cast %70 : vector<2x8x8xf32> to vector<16x8xf32>
    %72 = tpu.concatenate %65, %67, %69, %71 in 1 : vector<16x8xf32>, vector<16x8xf32>, vector<16x8xf32>, vector<16x8xf32> -> vector<16x32xf32>
    %c0_15 = arith.constant 0 : index
    %c0_16 = arith.constant 0 : index
    %73 = vector.load %arg3[%c0_15, %c0_16] : memref<32x32xf32, #tpu.memory_space<vmem>>, vector<32x32xf32>
    %cst_17 = arith.constant dense<0.000000e+00> : vector<16x32xf32>
    %74 = tpu.matmul %72, %73, %cst_17 {dimension_numbers = #tpu.dot_dimension_numbers<[1], [0], [0], [1], [0, 0, 1, 1], [], []>} : vector<16x32xf32>, vector<32x32xf32>, vector<16x32xf32> -> vector<16x32xf32>
    %75 = vector.broadcast %4 : vector<1x32xf32> to vector<16x32xf32>
    %76 = arith.addf %74, %75 : vector<16x32xf32>
    %77 = tpu.concatenate %76, %0 in 1 : vector<16x32xf32>, vector<16x32xf32> -> vector<16x64xf32>
    %c0_18 = arith.constant 0 : index
    %c0_19 = arith.constant 0 : index
    %78 = vector.load %arg4[%c0_18, %c0_19] : memref<64x64xf32, #tpu.memory_space<vmem>>, vector<64x64xf32>
    %cst_20 = arith.constant dense<0.000000e+00> : vector<16x64xf32>
    %79 = tpu.matmul %77, %78, %cst_20 {dimension_numbers = #tpu.dot_dimension_numbers<[1], [0], [0], [1], [0, 0, 1, 1], [], []>} : vector<16x64xf32>, vector<64x64xf32>, vector<16x64xf32> -> vector<16x64xf32>
    %80 = vector.broadcast %5 : vector<1x64xf32> to vector<16x64xf32>
    %81 = arith.addf %79, %80 : vector<16x64xf32>
    %82 = vector.extract_strided_slice %81 {offsets = [0, 0], sizes = [16, 32], strides = [1, 1]} : vector<16x64xf32> to vector<16x32xf32>
    %83 = arith.negf %82 : vector<16x32xf32>
    %84 = math.exp %83 : vector<16x32xf32>
    %cst_21 = arith.constant 1.000000e+00 : f32
    %85 = vector.broadcast %cst_21 : f32 to vector<16x32xf32>
    %86 = arith.addf %85, %84 : vector<16x32xf32>
    %87 = arith.divf %85, %86 : vector<16x32xf32>
    %88 = vector.extract_strided_slice %81 {offsets = [0, 32], sizes = [16, 32], strides = [1, 1]} : vector<16x64xf32> to vector<16x32xf32>
    %89 = arith.mulf %87, %88 : vector<16x32xf32>
    %90 = arith.addf %0, %89 : vector<16x32xf32>
    %cst_22 = arith.constant dense<0.000000e+00> : vector<16xf32>
    %91 = vector.multi_reduction <add>, %90, %cst_22 [1] : vector<16x32xf32> to vector<16xf32>
    %92 = vector.shape_cast %91 : vector<16xf32> to vector<16x1xf32>
    %cst_23 = arith.constant 3.200000e+01 : f32
    %93 = vector.broadcast %cst_23 : f32 to vector<16x1xf32>
    %94 = arith.divf %92, %93 : vector<16x1xf32>
    %95 = vector.broadcast %94 : vector<16x1xf32> to vector<16x32xf32>
    %96 = arith.subf %90, %95 : vector<16x32xf32>
    %97 = arith.mulf %96, %96 : vector<16x32xf32>
    %cst_24 = arith.constant dense<0.000000e+00> : vector<16xf32>
    %98 = vector.multi_reduction <add>, %97, %cst_24 [1] : vector<16x32xf32> to vector<16xf32>
    %99 = vector.shape_cast %98 : vector<16xf32> to vector<16x1xf32>
    %cst_25 = arith.constant 3.200000e+01 : f32
    %100 = vector.broadcast %cst_25 : f32 to vector<16x1xf32>
    %101 = arith.divf %99, %100 : vector<16x1xf32>
    %102 = vector.broadcast %94 : vector<16x1xf32> to vector<16x32xf32>
    %103 = arith.subf %90, %102 : vector<16x32xf32>
    %cst_26 = arith.constant 9.99999974E-6 : f32
    %104 = vector.broadcast %cst_26 : f32 to vector<16x1xf32>
    %105 = arith.addf %101, %104 : vector<16x1xf32>
    %106 = math.rsqrt %105 : vector<16x1xf32>
    %107 = vector.broadcast %106 : vector<16x1xf32> to vector<16x32xf32>
    %108 = arith.mulf %103, %107 : vector<16x32xf32>
    %109 = vector.broadcast %6 : vector<1x32xf32> to vector<16x32xf32>
    %110 = arith.mulf %108, %109 : vector<16x32xf32>
    %111 = vector.broadcast %7 : vector<1x32xf32> to vector<16x32xf32>
    %112 = arith.addf %110, %111 : vector<16x32xf32>
    %c0_27 = arith.constant 0 : index
    %c0_28 = arith.constant 0 : index
    %113 = vector.load %arg5[%c0_27, %c0_28] : memref<32x64xf32, #tpu.memory_space<vmem>>, vector<32x64xf32>
    %cst_29 = arith.constant dense<0.000000e+00> : vector<16x64xf32>
    %114 = tpu.matmul %112, %113, %cst_29 {dimension_numbers = #tpu.dot_dimension_numbers<[1], [0], [0], [1], [0, 0, 1, 1], [], []>} : vector<16x32xf32>, vector<32x64xf32>, vector<16x64xf32> -> vector<16x64xf32>
    %115 = vector.broadcast %8 : vector<1x64xf32> to vector<16x64xf32>
    %116 = arith.addf %114, %115 : vector<16x64xf32>
    %cst_30 = arith.constant 0.000000e+00 : f32
    %117 = vector.broadcast %cst_30 : f32 to vector<16x64xf32>
    %118 = arith.maximumf %116, %117 : vector<16x64xf32>
    %c0_31 = arith.constant 0 : index
    %c0_32 = arith.constant 0 : index
    %119 = vector.load %arg6[%c0_31, %c0_32] : memref<64x32xf32, #tpu.memory_space<vmem>>, vector<64x32xf32>
    %cst_33 = arith.constant dense<0.000000e+00> : vector<16x32xf32>
    %120 = tpu.matmul %118, %119, %cst_33 {dimension_numbers = #tpu.dot_dimension_numbers<[1], [0], [0], [1], [0, 0, 1, 1], [], []>} : vector<16x64xf32>, vector<64x32xf32>, vector<16x32xf32> -> vector<16x32xf32>
    %121 = vector.broadcast %9 : vector<1x32xf32> to vector<16x32xf32>
    %122 = arith.addf %120, %121 : vector<16x32xf32>
    %cst_34 = arith.constant 0.000000e+00 : f32
    %123 = vector.broadcast %cst_34 : f32 to vector<16x32xf32>
    %124 = arith.maximumf %122, %123 : vector<16x32xf32>
    %125 = arith.addf %112, %124 : vector<16x32xf32>
    %cst_35 = arith.constant dense<0.000000e+00> : vector<16xf32>
    %126 = vector.multi_reduction <add>, %125, %cst_35 [1] : vector<16x32xf32> to vector<16xf32>
    %127 = vector.shape_cast %126 : vector<16xf32> to vector<16x1xf32>
    %cst_36 = arith.constant 3.200000e+01 : f32
    %128 = vector.broadcast %cst_36 : f32 to vector<16x1xf32>
    %129 = arith.divf %127, %128 : vector<16x1xf32>
    %130 = vector.broadcast %129 : vector<16x1xf32> to vector<16x32xf32>
    %131 = arith.subf %125, %130 : vector<16x32xf32>
    %132 = arith.mulf %131, %131 : vector<16x32xf32>
    %cst_37 = arith.constant dense<0.000000e+00> : vector<16xf32>
    %133 = vector.multi_reduction <add>, %132, %cst_37 [1] : vector<16x32xf32> to vector<16xf32>
    %134 = vector.shape_cast %133 : vector<16xf32> to vector<16x1xf32>
    %cst_38 = arith.constant 3.200000e+01 : f32
    %135 = vector.broadcast %cst_38 : f32 to vector<16x1xf32>
    %136 = arith.divf %134, %135 : vector<16x1xf32>
    %137 = vector.broadcast %129 : vector<16x1xf32> to vector<16x32xf32>
    %138 = arith.subf %125, %137 : vector<16x32xf32>
    %cst_39 = arith.constant 9.99999974E-6 : f32
    %139 = vector.broadcast %cst_39 : f32 to vector<16x1xf32>
    %140 = arith.addf %136, %139 : vector<16x1xf32>
    %141 = math.rsqrt %140 : vector<16x1xf32>
    %142 = vector.broadcast %141 : vector<16x1xf32> to vector<16x32xf32>
    %143 = arith.mulf %138, %142 : vector<16x32xf32>
    %144 = vector.broadcast %10 : vector<1x32xf32> to vector<16x32xf32>
    %145 = arith.mulf %143, %144 : vector<16x32xf32>
    %146 = vector.broadcast %11 : vector<1x32xf32> to vector<16x32xf32>
    %147 = arith.addf %145, %146 : vector<16x32xf32>
    %c0_40 = arith.constant 0 : index
    %c0_41 = arith.constant 0 : index
    %148 = vector.load %arg8[%c0_40, %c0_41] : memref<16x32xf32, #tpu.memory_space<vmem>>, vector<16x32xf32>
    tpu.vector_store %arg8[%c0_40, %c0_41], %147 {strides = array<i32>} : memref<16x32xf32, #tpu.memory_space<vmem>>, vector<16x32xf32>,
    return
  }
}

</mosaic_0001>

<llo_original>
// kernel: tpu_custom_call.1
$region0: #{tpu_custom_call.1}
  #allocation0 [shape = 'u32[]', space=smem, size = 0x4, offset = 0x4, fixed_abs, tag = 'smem constant byte address 0x4 - core index']
  #allocation1 [shape = 'u32[144,128]{1,0:T(1,128)}', space=vmem, size = 0x12000, scoped, tag = 'internal scratch']
  %s0 = inlined_call_operand.hbm [shape: f32[16,32], index: 0, kind: input, shape index: {}]
  %s1 = inlined_call_operand.vmem [shape: f32[2,1,8], index: 1, kind: input, shape index: {}]
  %s2 = inlined_call_operand.vmem [shape: f32[32,96], index: 2, kind: input, shape index: {}]
  %s3 = inlined_call_operand.hbm [shape: f32[32,32], index: 3, kind: input, shape index: {}]
  %s4 = inlined_call_operand.vmem [shape: f32[64,64], index: 4, kind: input, shape index: {}]
  %s5 = inlined_call_operand.hbm [shape: f32[32,64], index: 5, kind: input, shape index: {}]
  %s6 = inlined_call_operand.vmem [shape: f32[64,32], index: 6, kind: input, shape index: {}]
  %s7 = inlined_call_operand.hbm [shape: f32[9,96], index: 7, kind: input, shape index: {}]
  %s8 = inlined_call_operand.hbm [shape: f32[16,32], index: 8, kind: output, shape index: {}]
  %s9 = sld [smem:[#allocation0]]
  $region58: #{tpu_custom_call.1} parent=0
    _
  %s11 = ssub.s32 1, %s9
  %s12 = scalar_select 0, %s11, %s9
  $region1: #{tpu_custom_call.1} parent=0
    #allocation2 [shape = 'u8[8192]{0}', space=vmem, size = 0x2000, scoped, tag = 'input window, operand 0, single buffered']
    #allocation3 [shape = 's32[1]{0}', space=sflag, size = 0x4, scoped, tag = 'scoped memory for tpu_custom_call.1']
    #allocation4 [shape = 's32[1]{0}', space=sflag, size = 0x4, scoped, tag = 'scoped memory for tpu_custom_call.1']
    #allocation5 [shape = 'u8[16384]{0}', space=vmem, size = 0x4000, scoped, tag = 'input window, operand 3, single buffered']
    #allocation6 [shape = 's32[1]{0}', space=sflag, size = 0x4, scoped, tag = 'scoped memory for tpu_custom_call.1']
    #allocation7 [shape = 'u8[16384]{0}', space=vmem, size = 0x4000, scoped, tag = 'input window, operand 5, single buffered']
    #allocation8 [shape = 'u8[8192]{0}', space=vmem, size = 0x2000, scoped, tag = 'input window, operand 7, single buffered']
    #allocation9 [shape = 's32[1]{0}', space=sflag, size = 0x4, scoped, tag = 'scoped memory for tpu_custom_call.1']
    #allocation10 [shape = 'u8[8192]{0}', space=vmem, size = 0x2000, scoped, tag = 'output window, operand 0, single buffered']
    %13 = vsyncpa [#allocation3], 0
    %14 = vsyncpa [#allocation6], 0
    %15 = vsyncpa [#allocation9], 0
    %16 = vsyncpa [#allocation4], 0
    // Predicated region
    $region2: #{tpu_custom_call.1} parent=1 // pred_check
      _
    $region3: #{tpu_custom_call.1} parent=1 // pred_check_branch
      %18 = sbr.rel (0) target = $region5
    $region4: #{tpu_custom_call.1} parent=1 // pred_region
      %s20 = ssub.s32 256, 256
      %21 = vsyncadd [#allocation3], %s20
      %s22 = sshll.u32 [#allocation2], 4
      %s23 = int_to_ptr.vmem [resolvable:$true] %s22
      %28 = dma.hbm_to_vmem [thread:$0]  %s0, 256, %s23, [#allocation3], 128, 128, 8
    $region5: #{tpu_custom_call.1} parent=1 // pred_fallthru
      _
    // Predicated region
    $region6: #{tpu_custom_call.1} parent=1 // pred_check
      _
    $region7: #{tpu_custom_call.1} parent=1 // pred_check_branch
      %30 = sbr.rel (0) target = $region9
    $region8: #{tpu_custom_call.1} parent=1 // pred_region
      _
    $region9: #{tpu_custom_call.1} parent=1 // pred_fallthru
      _
    // Predicated region
    $region10: #{tpu_custom_call.1} parent=1 // pred_check
      _
    $region11: #{tpu_custom_call.1} parent=1 // pred_check_branch
      %32 = sbr.rel (0) target = $region13
    $region12: #{tpu_custom_call.1} parent=1 // pred_region
      _
    $region13: #{tpu_custom_call.1} parent=1 // pred_fallthru
      _
    // Predicated region
    $region14: #{tpu_custom_call.1} parent=1 // pred_check
      _
    $region15: #{tpu_custom_call.1} parent=1 // pred_check_branch
      %34 = sbr.rel (0) target = $region17
    $region16: #{tpu_custom_call.1} parent=1 // pred_region
      %s36 = ssub.s32 512, 512
      %37 = vsyncadd [#allocation6], %s36
      %s38 = sshll.u32 [#allocation5], 4
      %s39 = int_to_ptr.vmem [resolvable:$true] %s38
      %44 = dma.hbm_to_vmem [thread:$0]  %s3, 512, %s39, [#allocation6], 128, 128, 8
    $region17: #{tpu_custom_call.1} parent=1 // pred_fallthru
      _
    // Predicated region
    $region18: #{tpu_custom_call.1} parent=1 // pred_check
      _
    $region19: #{tpu_custom_call.1} parent=1 // pred_check_branch
      %46 = sbr.rel (0) target = $region21
    $region20: #{tpu_custom_call.1} parent=1 // pred_region
      _
    $region21: #{tpu_custom_call.1} parent=1 // pred_fallthru
      _
    // Predicated region
    $region22: #{tpu_custom_call.1} parent=1 // pred_check
      _
    $region23: #{tpu_custom_call.1} parent=1 // pred_check_branch
      %48 = sbr.rel (0) target = $region25
    $region24: #{tpu_custom_call.1} parent=1 // pred_region
      %s50 = ssub.s32 512, 512
      %51 = vsyncadd [#allocation6], %s50
      %s52 = sshll.u32 [#allocation7], 4
      %s53 = int_to_ptr.vmem [resolvable:$true] %s52
      %58 = dma.hbm_to_vmem [thread:$0]  %s5, 512, %s53, [#allocation6], 128, 128, 8
    $region25: #{tpu_custom_call.1} parent=1 // pred_fallthru
      _
    // Predicated region
    $region26: #{tpu_custom_call.1} parent=1 // pred_check
      _
    $region27: #{tpu_custom_call.1} parent=1 // pred_check_branch
      %60 = sbr.rel (0) target = $region29
    $region28: #{tpu_custom_call.1} parent=1 // pred_region
      _
    $region29: #{tpu_custom_call.1} parent=1 // pred_fallthru
      _
    // Predicated region
    $region30: #{tpu_custom_call.1} parent=1 // pred_check
      _
    $region31: #{tpu_custom_call.1} parent=1 // pred_check_branch
      %62 = sbr.rel (0) target = $region33
    $region32: #{tpu_custom_call.1} parent=1 // pred_region
      %s64 = ssub.s32 256, 256
      %65 = vsyncadd [#allocation9], %s64
      %s66 = sshll.u32 [#allocation8], 4
      %s67 = int_to_ptr.vmem [resolvable:$true] %s66
      %72 = dma.hbm_to_vmem [thread:$0]  %s7, 256, %s67, [#allocation9], 128, 128, 8
    $region33: #{tpu_custom_call.1} parent=1 // pred_fallthru
      _
    // Predicated region
    $region34: #{tpu_custom_call.1} parent=1 // pred_check
      _
    $region35: #{tpu_custom_call.1} parent=1 // pred_check_branch
      %74 = sbr.rel (0) target = $region37
    $region36: #{tpu_custom_call.1} parent=1 // pred_region
      %75 = dma.done [#allocation3], 256
    $region37: #{tpu_custom_call.1} parent=1 // pred_fallthru
      _
    // Predicated region
    $region38: #{tpu_custom_call.1} parent=1 // pred_check
      _
    $region39: #{tpu_custom_call.1} parent=1 // pred_check_branch
      %77 = sbr.rel (0) target = $region41
    $region40: #{tpu_custom_call.1} parent=1 // pred_region
      %78 = dma.done [#allocation6], 512
    $region41: #{tpu_custom_call.1} parent=1 // pred_fallthru
      _
    // Predicated region
    $region42: #{tpu_custom_call.1} parent=1 // pred_check
      _
    $region43: #{tpu_custom_call.1} parent=1 // pred_check_branch
      %80 = sbr.rel (0) target = $region45
    $region44: #{tpu_custom_call.1} parent=1 // pred_region
      %81 = dma.done [#allocation6], 512
    $region45: #{tpu_custom_call.1} parent=1 // pred_fallthru
      _
    // Predicated region
    $region46: #{tpu_custom_call.1} parent=1 // pred_check
      _
    $region47: #{tpu_custom_call.1} parent=1 // pred_check_branch
      %83 = sbr.rel (0) target = $region49
    $region48: #{tpu_custom_call.1} parent=1 // pred_region
      %84 = dma.done [#allocation9], 256
    $region49: #{tpu_custom_call.1} parent=1 // pred_fallthru
      _
    %v85 = vld [vmem:[#allocation2] sm:$0xff]
    %v86 = vld [vmem:[#allocation2 + $0x8] sm:$0xff]
    %v87 = vld [vmem:[%s1] sm:$0x1]
    %v88 = vld [vmem:[%s1 + $0x1] sm:$0x1]
    %v89 = vld [vmem:[#allocation8] sm:$0xff]
    %v90 = vld [vmem:[#allocation8 + $0x8] sm:$0x1]
    %v91 = vld [vmem:[%s2] sm:$0xff]
    %v92 = vld [vmem:[%s2 + $0x8] sm:$0xff]
    %v93 = vld [vmem:[%s2 + $0x10] sm:$0xff]
    %v94 = vld [vmem:[%s2 + $0x18] sm:$0xff]
    %v95 = vlaneseq
    %v96 = vshrl.u32 %v95, 7
    %v97 = vsub.s32 0, %v96
    %v98 = vrot.slane %v89, %v97
    %vm99 = vcmask 261120
    %v101 = vsel %vm99, %v85, 0
    %v104 = vsel %vm99, %v86, 0
    %106 = vmatprep.subr.mxu0 0.0
    %107 = vmatpush1.msra.mxu0 0.0
    %108 = vmatprep.subr.mxu0 0.0
    %109 = vmatpush1.msra.mxu0 0.0
    %110 = vmatprep.subr.mxu0 0.0
    %111 = vmatpush1.msra.mxu0 0.0
    %112 = vmatprep.subr.mxu0 0.0
    %113 = vmatpush1.msra.mxu0 0.0
    %114 = vmatprep.subr.mxu0 0.0
    %115 = vmatpush1.msra.mxu0 0.0
    %116 = vmatprep.subr.mxu0 0.0
    %117 = vmatpush1.msra.mxu0 0.0
    %118 = vmatprep.subr.mxu0 0.0
    %119 = vmatpush1.msra.mxu0 0.0
    %120 = vmatprep.subr.mxu0 0.0
    %121 = vmatpush1.msra.mxu0 0.0
    %122 = vmatprep.subr.mxu0 0.0
    %123 = vmatpush1.msra.mxu0 0.0
    %124 = vmatprep.subr.mxu0 0.0
    %125 = vmatpush1.msra.mxu0 0.0
    %126 = vmatprep.subr.mxu0 0.0
    %127 = vmatpush1.msra.mxu0 0.0
    %128 = vmatprep.subr.mxu0 0.0
    %129 = vmatpush1.msra.mxu0 0.0
    %130 = vmatprep.subr.mxu0 0.0
    %131 = vmatpush1.msra.mxu0 %v94
    %132 = vmatprep.subr.mxu0 0.0
    %133 = vmatpush1.msra.mxu0 %v93
    %134 = vmatprep.subr.mxu0 0.0
    %135 = vmatpush1.msra.mxu0 %v92
    %136 = vmatprep.subr.mxu0 0.0
    %137 = vmatpush1.msra.mxu0 %v91
    %138 = vmatprep.subr.mxu0 0.0
    %139 = vmatpush2.msra.mxu0 0.0
    %140 = vmatprep.subr.mxu0 0.0
    %141 = vmatpush2.msra.mxu0 0.0
    %142 = vmatprep.subr.mxu0 0.0
    %143 = vmatpush2.msra.mxu0 0.0
    %144 = vmatprep.subr.mxu0 0.0
    %145 = vmatpush2.msra.mxu0 0.0
    %146 = vmatprep.subr.mxu0 0.0
    %147 = vmatpush2.msra.mxu0 0.0
    %148 = vmatprep.subr.mxu0 0.0
    %149 = vmatpush2.msra.mxu0 0.0
    %150 = vmatprep.subr.mxu0 0.0
    %151 = vmatpush2.msra.mxu0 0.0
    %152 = vmatprep.subr.mxu0 0.0
    %153 = vmatpush2.msra.mxu0 0.0
    %154 = vmatprep.subr.mxu0 0.0
    %155 = vmatpush2.msra.mxu0 0.0
    %156 = vmatprep.subr.mxu0 0.0
    %157 = vmatpush2.msra.mxu0 0.0
    %158 = vmatprep.subr.mxu0 0.0
    %159 = vmatpush2.msra.mxu0 0.0
    %160 = vmatprep.subr.mxu0 0.0
    %161 = vmatpush2.msra.mxu0 0.0
    %162 = vmatprep.subr.mxu0 0.0
    %163 = vmatpush2.msra.mxu0 0.0
    %164 = vmatprep.subr.mxu0 0.0
    %165 = vmatpush2.msra.mxu0 0.0
    %166 = vmatprep.subr.mxu0 0.0
    %167 = vmatpush2.msra.mxu0 0.0
    %168 = vmatprep.subr.mxu0 0.0
    %169 = vmatpush2.msra.mxu0 0.0
    %170 = vmatprep.mubr.f32.mxu0 0.0
    %171 = vmatmul.mubr.f32.gmra.mxu0 %v101
    %v172 = vpop.f32.mrf.mxu0
    %v173 = vadd.f32 %v98, %v172
    %v174 = vpop.f32.mrf.mxu0
    %175 = vmatprep.mubr.f32.mxu0 0.0
    %176 = vmatmul.mubr.f32.gmra.mxu0 %v104
    %v177 = vpop.f32.mrf.mxu0
    %v178 = vadd.f32 %v98, %v177
    %v179 = vpop.f32.mrf.mxu0
    %180 = vdwg.mxu0
    %183 = vrot.lane.b32.xlu0 %v173, 120
    %v184 = vpop.permute.xlu0 %183
    %185 = vrot.lane.b32.xlu0 %v178, 120
    %v186 = vpop.permute.xlu0 %185
    %187 = vrot.lane.b32.xlu0 %v173, 112
    %v188 = vpop.permute.xlu0 %187
    %189 = vrot.lane.b32.xlu0 %v178, 112
    %v190 = vpop.permute.xlu0 %189
    %191 = vrot.lane.b32.xlu0 %v173, 104
    %v192 = vpop.permute.xlu0 %191
    %193 = vrot.lane.b32.xlu0 %v178, 104
    %v194 = vpop.permute.xlu0 %193
    %195 = vrot.lane.b32.xlu0 %v173, 96
    %v196 = vpop.permute.xlu0 %195
    %vm197 = vcmask 64512
    %v198 = vsel %vm197, %v173, 0
    %v200 = vsel %vm197, %v196, 0
    %202 = vmatprep.subr.mxu0 0.0
    %203 = vmatpush1.xpose.msra.mxu0 0.0
    %204 = vmatprep.subr.mxu0 0.0
    %205 = vmatpush1.xpose.msra.mxu0 0.0
    %206 = vmatprep.subr.mxu0 0.0
    %207 = vmatpush1.xpose.msra.mxu0 0.0
    %208 = vmatprep.subr.mxu0 0.0
    %209 = vmatpush1.xpose.msra.mxu0 0.0
    %210 = vmatprep.subr.mxu0 0.0
    %211 = vmatpush1.xpose.msra.mxu0 0.0
    %212 = vmatprep.subr.mxu0 0.0
    %213 = vmatpush1.xpose.msra.mxu0 0.0
    %214 = vmatprep.subr.mxu0 0.0
    %215 = vmatpush1.xpose.msra.mxu0 0.0
    %216 = vmatprep.subr.mxu0 0.0
    %217 = vmatpush1.xpose.msra.mxu0 0.0
    %218 = vmatprep.subr.mxu0 0.0
    %219 = vmatpush1.xpose.msra.mxu0 0.0
    %220 = vmatprep.subr.mxu0 0.0
    %221 = vmatpush1.xpose.msra.mxu0 0.0
    %222 = vmatprep.subr.mxu0 0.0
    %223 = vmatpush1.xpose.msra.mxu0 0.0
    %224 = vmatprep.subr.mxu0 0.0
    %225 = vmatpush1.xpose.msra.mxu0 0.0
    %226 = vmatprep.subr.mxu0 0.0
    %227 = vmatpush1.xpose.msra.mxu0 0.0
    %228 = vmatprep.subr.mxu0 0.0
    %229 = vmatpush1.xpose.msra.mxu0 0.0
    %230 = vmatprep.subr.mxu0 0.0
    %231 = vmatpush1.xpose.msra.mxu0 0.0
    %232 = vmatprep.subr.mxu0 0.0
    %233 = vmatpush1.xpose.msra.mxu0 %v200
    %234 = vmatprep.subr.mxu0 0.0
    %235 = vmatpush2.xpose.msra.mxu0 0.0
    %236 = vmatprep.subr.mxu0 0.0
    %237 = vmatpush2.xpose.msra.mxu0 0.0
    %238 = vmatprep.subr.mxu0 0.0
    %239 = vmatpush2.xpose.msra.mxu0 0.0
    %240 = vmatprep.subr.mxu0 0.0
    %241 = vmatpush2.xpose.msra.mxu0 0.0
    %242 = vmatprep.subr.mxu0 0.0
    %243 = vmatpush2.xpose.msra.mxu0 0.0
    %244 = vmatprep.subr.mxu0 0.0
    %245 = vmatpush2.xpose.msra.mxu0 0.0
    %246 = vmatprep.subr.mxu0 0.0
    %247 = vmatpush2.xpose.msra.mxu0 0.0
    %248 = vmatprep.subr.mxu0 0.0
    %249 = vmatpush2.xpose.msra.mxu0 0.0
    %250 = vmatprep.subr.mxu0 0.0
    %251 = vmatpush2.xpose.msra.mxu0 0.0
    %252 = vmatprep.subr.mxu0 0.0
    %253 = vmatpush2.xpose.msra.mxu0 0.0
    %254 = vmatprep.subr.mxu0 0.0
    %255 = vmatpush2.xpose.msra.mxu0 0.0
    %256 = vmatprep.subr.mxu0 0.0
    %257 = vmatpush2.xpose.msra.mxu0 0.0
    %258 = vmatprep.subr.mxu0 0.0
    %259 = vmatpush2.xpose.msra.mxu0 0.0
    %260 = vmatprep.subr.mxu0 0.0
    %261 = vmatpush2.xpose.msra.mxu0 0.0
    %262 = vmatprep.subr.mxu0 0.0
    %263 = vmatpush2.xpose.msra.mxu0 0.0
    %264 = vmatprep.subr.mxu0 0.0
    %265 = vmatpush2.xpose.msra.mxu0 0.0
    %266 = vmatprep.mubr.f32.mxu0 0.0
    %267 = vmatmul.mubr.f32.gmra.mxu0 %v198
    %v268 = vpop.f32.mrf.mxu0
    %v269 = vadd.f32 0.0, %v268
    %v270 = vpop.f32.mrf.mxu0
    %271 = vdwg.mxu0
    %272 = vrot.lane.b32.xlu0 %v178, 96
    %v273 = vpop.permute.xlu0 %272
    %v274 = vsel %vm197, %v178, 0
    %v276 = vsel %vm197, %v273, 0
    %278 = vmatprep.subr.mxu0 0.0
    %279 = vmatpush1.xpose.msra.mxu0 0.0
    %280 = vmatprep.subr.mxu0 0.0
    %281 = vmatpush1.xpose.msra.mxu0 0.0
    %282 = vmatprep.subr.mxu0 0.0
    %283 = vmatpush1.xpose.msra.mxu0 0.0
    %284 = vmatprep.subr.mxu0 0.0
    %285 = vmatpush1.xpose.msra.mxu0 0.0
    %286 = vmatprep.subr.mxu0 0.0
    %287 = vmatpush1.xpose.msra.mxu0 0.0
    %288 = vmatprep.subr.mxu0 0.0
    %289 = vmatpush1.xpose.msra.mxu0 0.0
    %290 = vmatprep.subr.mxu0 0.0
    %291 = vmatpush1.xpose.msra.mxu0 0.0
    %292 = vmatprep.subr.mxu0 0.0
    %293 = vmatpush1.xpose.msra.mxu0 0.0
    %294 = vmatprep.subr.mxu0 0.0
    %295 = vmatpush1.xpose.msra.mxu0 0.0
    %296 = vmatprep.subr.mxu0 0.0
    %297 = vmatpush1.xpose.msra.mxu0 0.0
    %298 = vmatprep.subr.mxu0 0.0
    %299 = vmatpush1.xpose.msra.mxu0 0.0
    %300 = vmatprep.subr.mxu0 0.0
    %301 = vmatpush1.xpose.msra.mxu0 0.0
    %302 = vmatprep.subr.mxu0 0.0
    %303 = vmatpush1.xpose.msra.mxu0 0.0
    %304 = vmatprep.subr.mxu0 0.0
    %305 = vmatpush1.xpose.msra.mxu0 0.0
    %306 = vmatprep.subr.mxu0 0.0
    %307 = vmatpush1.xpose.msra.mxu0 0.0
    %308 = vmatprep.subr.mxu0 0.0
    %309 = vmatpush1.xpose.msra.mxu0 %v276
    %310 = vmatprep.subr.mxu0 0.0
    %311 = vmatpush2.xpose.msra.mxu0 0.0
    %312 = vmatprep.subr.mxu0 0.0
    %313 = vmatpush2.xpose.msra.mxu0 0.0
    %314 = vmatprep.subr.mxu0 0.0
    %315 = vmatpush2.xpose.msra.mxu0 0.0
    %316 = vmatprep.subr.mxu0 0.0
    %317 = vmatpush2.xpose.msra.mxu0 0.0
    %318 = vmatprep.subr.mxu0 0.0
    %319 = vmatpush2.xpose.msra.mxu0 0.0
    %320 = vmatprep.subr.mxu0 0.0
    %321 = vmatpush2.xpose.msra.mxu0 0.0
    %322 = vmatprep.subr.mxu0 0.0
    %323 = vmatpush2.xpose.msra.mxu0 0.0
    %324 = vmatprep.subr.mxu0 0.0
    %325 = vmatpush2.xpose.msra.mxu0 0.0
    %326 = vmatprep.subr.mxu0 0.0
    %327 = vmatpush2.xpose.msra.mxu0 0.0
    %328 = vmatprep.subr.mxu0 0.0
    %329 = vmatpush2.xpose.msra.mxu0 0.0
    %330 = vmatprep.subr.mxu0 0.0
    %331 = vmatpush2.xpose.msra.mxu0 0.0
    %332 = vmatprep.subr.mxu0 0.0
    %333 = vmatpush2.xpose.msra.mxu0 0.0
    %334 = vmatprep.subr.mxu0 0.0
    %335 = vmatpush2.xpose.msra.mxu0 0.0
    %336 = vmatprep.subr.mxu0 0.0
    %337 = vmatpush2.xpose.msra.mxu0 0.0
    %338 = vmatprep.subr.mxu0 0.0
    %339 = vmatpush2.xpose.msra.mxu0 0.0
    %340 = vmatprep.subr.mxu0 0.0
    %341 = vmatpush2.xpose.msra.mxu0 0.0
    %342 = vmatprep.mubr.f32.mxu0 0.0
    %343 = vmatmul.mubr.f32.gmra.mxu0 %v274
    %v344 = vpop.f32.mrf.mxu0
    %v345 = vadd.f32 0.0, %v344
    %v346 = vpop.f32.mrf.mxu0
    %347 = vdwg.mxu0
    %348 = vrot.lane.b32.xlu0 %v184, 96
    %v349 = vpop.permute.xlu0 %348
    %v350 = vsel %vm197, %v184, 0
    %v352 = vsel %vm197, %v349, 0
    %354 = vmatprep.subr.mxu0 0.0
    %355 = vmatpush1.xpose.msra.mxu0 0.0
    %356 = vmatprep.subr.mxu0 0.0
    %357 = vmatpush1.xpose.msra.mxu0 0.0
    %358 = vmatprep.subr.mxu0 0.0
    %359 = vmatpush1.xpose.msra.mxu0 0.0
    %360 = vmatprep.subr.mxu0 0.0
    %361 = vmatpush1.xpose.msra.mxu0 0.0
    %362 = vmatprep.subr.mxu0 0.0
    %363 = vmatpush1.xpose.msra.mxu0 0.0
    %364 = vmatprep.subr.mxu0 0.0
    %365 = vmatpush1.xpose.msra.mxu0 0.0
    %366 = vmatprep.subr.mxu0 0.0
    %367 = vmatpush1.xpose.msra.mxu0 0.0
    %368 = vmatprep.subr.mxu0 0.0
    %369 = vmatpush1.xpose.msra.mxu0 0.0
    %370 = vmatprep.subr.mxu0 0.0
    %371 = vmatpush1.xpose.msra.mxu0 0.0
    %372 = vmatprep.subr.mxu0 0.0
    %373 = vmatpush1.xpose.msra.mxu0 0.0
    %374 = vmatprep.subr.mxu0 0.0
    %375 = vmatpush1.xpose.msra.mxu0 0.0
    %376 = vmatprep.subr.mxu0 0.0
    %377 = vmatpush1.xpose.msra.mxu0 0.0
    %378 = vmatprep.subr.mxu0 0.0
    %379 = vmatpush1.xpose.msra.mxu0 0.0
    %380 = vmatprep.subr.mxu0 0.0
    %381 = vmatpush1.xpose.msra.mxu0 0.0
    %382 = vmatprep.subr.mxu0 0.0
    %383 = vmatpush1.xpose.msra.mxu0 0.0
    %384 = vmatprep.subr.mxu0 0.0
    %385 = vmatpush1.xpose.msra.mxu0 %v352
    %386 = vmatprep.subr.mxu0 0.0
    %387 = vmatpush2.xpose.msra.mxu0 0.0
    %388 = vmatprep.subr.mxu0 0.0
    %389 = vmatpush2.xpose.msra.mxu0 0.0
    %390 = vmatprep.subr.mxu0 0.0
    %391 = vmatpush2.xpose.msra.mxu0 0.0
    %392 = vmatprep.subr.mxu0 0.0
    %393 = vmatpush2.xpose.msra.mxu0 0.0
    %394 = vmatprep.subr.mxu0 0.0
    %395 = vmatpush2.xpose.msra.mxu0 0.0
    %396 = vmatprep.subr.mxu0 0.0
    %397 = vmatpush2.xpose.msra.mxu0 0.0
    %398 = vmatprep.subr.mxu0 0.0
    %399 = vmatpush2.xpose.msra.mxu0 0.0
    %400 = vmatprep.subr.mxu0 0.0
    %401 = vmatpush2.xpose.msra.mxu0 0.0
    %402 = vmatprep.subr.mxu0 0.0
    %403 = vmatpush2.xpose.msra.mxu0 0.0
    %404 = vmatprep.subr.mxu0 0.0
    %405 = vmatpush2.xpose.msra.mxu0 0.0
    %406 = vmatprep.subr.mxu0 0.0
    %407 = vmatpush2.xpose.msra.mxu0 0.0
    %408 = vmatprep.subr.mxu0 0.0
    %409 = vmatpush2.xpose.msra.mxu0 0.0
    %410 = vmatprep.subr.mxu0 0.0
    %411 = vmatpush2.xpose.msra.mxu0 0.0
    %412 = vmatprep.subr.mxu0 0.0
    %413 = vmatpush2.xpose.msra.mxu0 0.0
    %414 = vmatprep.subr.mxu0 0.0
    %415 = vmatpush2.xpose.msra.mxu0 0.0
    %416 = vmatprep.subr.mxu0 0.0
    %417 = vmatpush2.xpose.msra.mxu0 0.0
    %418 = vmatprep.mubr.f32.mxu0 0.0
    %419 = vmatmul.mubr.f32.gmra.mxu0 %v350
    %v420 = vpop.f32.mrf.mxu0
    %v421 = vadd.f32 0.0, %v420
    %v422 = vpop.f32.mrf.mxu0
    %423 = vdwg.mxu0
    %424 = vrot.lane.b32.xlu0 %v186, 96
    %v425 = vpop.permute.xlu0 %424
    %v426 = vsel %vm197, %v186, 0
    %v428 = vsel %vm197, %v425, 0
    %430 = vmatprep.subr.mxu0 0.0
    %431 = vmatpush1.xpose.msra.mxu0 0.0
    %432 = vmatprep.subr.mxu0 0.0
    %433 = vmatpush1.xpose.msra.mxu0 0.0
    %434 = vmatprep.subr.mxu0 0.0
    %435 = vmatpush1.xpose.msra.mxu0 0.0
    %436 = vmatprep.subr.mxu0 0.0
    %437 = vmatpush1.xpose.msra.mxu0 0.0
    %438 = vmatprep.subr.mxu0 0.0
    %439 = vmatpush1.xpose.msra.mxu0 0.0
    %440 = vmatprep.subr.mxu0 0.0
    %441 = vmatpush1.xpose.msra.mxu0 0.0
    %442 = vmatprep.subr.mxu0 0.0
    %443 = vmatpush1.xpose.msra.mxu0 0.0
    %444 = vmatprep.subr.mxu0 0.0
    %445 = vmatpush1.xpose.msra.mxu0 0.0
    %446 = vmatprep.subr.mxu0 0.0
    %447 = vmatpush1.xpose.msra.mxu0 0.0
    %448 = vmatprep.subr.mxu0 0.0
    %449 = vmatpush1.xpose.msra.mxu0 0.0
    %450 = vmatprep.subr.mxu0 0.0
    %451 = vmatpush1.xpose.msra.mxu0 0.0
    %452 = vmatprep.subr.mxu0 0.0
    %453 = vmatpush1.xpose.msra.mxu0 0.0
    %454 = vmatprep.subr.mxu0 0.0
    %455 = vmatpush1.xpose.msra.mxu0 0.0
    %456 = vmatprep.subr.mxu0 0.0
    %457 = vmatpush1.xpose.msra.mxu0 0.0
    %458 = vmatprep.subr.mxu0 0.0
    %459 = vmatpush1.xpose.msra.mxu0 0.0
    %460 = vmatprep.subr.mxu0 0.0
    %461 = vmatpush1.xpose.msra.mxu0 %v428
    %462 = vmatprep.subr.mxu0 0.0
    %463 = vmatpush2.xpose.msra.mxu0 0.0
    %464 = vmatprep.subr.mxu0 0.0
    %465 = vmatpush2.xpose.msra.mxu0 0.0
    %466 = vmatprep.subr.mxu0 0.0
    %467 = vmatpush2.xpose.msra.mxu0 0.0
    %468 = vmatprep.subr.mxu0 0.0
    %469 = vmatpush2.xpose.msra.mxu0 0.0
    %470 = vmatprep.subr.mxu0 0.0
    %471 = vmatpush2.xpose.msra.mxu0 0.0
    %472 = vmatprep.subr.mxu0 0.0
    %473 = vmatpush2.xpose.msra.mxu0 0.0
    %474 = vmatprep.subr.mxu0 0.0
    %475 = vmatpush2.xpose.msra.mxu0 0.0
    %476 = vmatprep.subr.mxu0 0.0
    %477 = vmatpush2.xpose.msra.mxu0 0.0
    %478 = vmatprep.subr.mxu0 0.0
    %479 = vmatpush2.xpose.msra.mxu0 0.0
    %480 = vmatprep.subr.mxu0 0.0
    %481 = vmatpush2.xpose.msra.mxu0 0.0
    %482 = vmatprep.subr.mxu0 0.0
    %483 = vmatpush2.xpose.msra.mxu0 0.0
    %484 = vmatprep.subr.mxu0 0.0
    %485 = vmatpush2.xpose.msra.mxu0 0.0
    %486 = vmatprep.subr.mxu0 0.0
    %487 = vmatpush2.xpose.msra.mxu0 0.0
    %488 = vmatprep.subr.mxu0 0.0
    %489 = vmatpush2.xpose.msra.mxu0 0.0
    %490 = vmatprep.subr.mxu0 0.0
    %491 = vmatpush2.xpose.msra.mxu0 0.0
    %492 = vmatprep.subr.mxu0 0.0
    %493 = vmatpush2.xpose.msra.mxu0 0.0
    %494 = vmatprep.mubr.f32.mxu0 0.0
    %495 = vmatmul.mubr.f32.gmra.mxu0 %v426
    %v496 = vpop.f32.mrf.mxu0
    %v497 = vadd.f32 0.0, %v496
    %v498 = vpop.f32.mrf.mxu0
    %499 = vdwg.mxu0
    %500 = vrot.lane.b32.xlu0 %v188, 96
    %v501 = vpop.permute.xlu0 %500
    %v502 = vsel %vm197, %v188, 0
    %v504 = vsel %vm197, %v501, 0
    %506 = vmatprep.subr.mxu0 0.0
    %507 = vmatpush1.xpose.msra.mxu0 0.0
    %508 = vmatprep.subr.mxu0 0.0
    %509 = vmatpush1.xpose.msra.mxu0 0.0
    %510 = vmatprep.subr.mxu0 0.0
    %511 = vmatpush1.xpose.msra.mxu0 0.0
    %512 = vmatprep.subr.mxu0 0.0
    %513 = vmatpush1.xpose.msra.mxu0 0.0
    %514 = vmatprep.subr.mxu0 0.0
    %515 = vmatpush1.xpose.msra.mxu0 0.0
    %516 = vmatprep.subr.mxu0 0.0
    %517 = vmatpush1.xpose.msra.mxu0 0.0
    %518 = vmatprep.subr.mxu0 0.0
    %519 = vmatpush1.xpose.msra.mxu0 0.0
    %520 = vmatprep.subr.mxu0 0.0
    %521 = vmatpush1.xpose.msra.mxu0 0.0
    %522 = vmatprep.subr.mxu0 0.0
    %523 = vmatpush1.xpose.msra.mxu0 0.0
    %524 = vmatprep.subr.mxu0 0.0
    %525 = vmatpush1.xpose.msra.mxu0 0.0
    %526 = vmatprep.subr.mxu0 0.0
    %527 = vmatpush1.xpose.msra.mxu0 0.0
    %528 = vmatprep.subr.mxu0 0.0
    %529 = vmatpush1.xpose.msra.mxu0 0.0
    %530 = vmatprep.subr.mxu0 0.0
    %531 = vmatpush1.xpose.msra.mxu0 0.0
    %532 = vmatprep.subr.mxu0 0.0
    %533 = vmatpush1.xpose.msra.mxu0 0.0
    %534 = vmatprep.subr.mxu0 0.0
    %535 = vmatpush1.xpose.msra.mxu0 0.0
    %536 = vmatprep.subr.mxu0 0.0
    %537 = vmatpush1.xpose.msra.mxu0 %v504
    %538 = vmatprep.subr.mxu0 0.0
    %539 = vmatpush2.xpose.msra.mxu0 0.0
    %540 = vmatprep.subr.mxu0 0.0
    %541 = vmatpush2.xpose.msra.mxu0 0.0
    %542 = vmatprep.subr.mxu0 0.0
    %543 = vmatpush2.xpose.msra.mxu0 0.0
    %544 = vmatprep.subr.mxu0 0.0
    %545 = vmatpush2.xpose.msra.mxu0 0.0
    %546 = vmatprep.subr.mxu0 0.0
    %547 = vmatpush2.xpose.msra.mxu0 0.0
    %548 = vmatprep.subr.mxu0 0.0
    %549 = vmatpush2.xpose.msra.mxu0 0.0
    %550 = vmatprep.subr.mxu0 0.0
    %551 = vmatpush2.xpose.msra.mxu0 0.0
    %552 = vmatprep.subr.mxu0 0.0
    %553 = vmatpush2.xpose.msra.mxu0 0.0
    %554 = vmatprep.subr.mxu0 0.0
    %555 = vmatpush2.xpose.msra.mxu0 0.0
    %556 = vmatprep.subr.mxu0 0.0
    %557 = vmatpush2.xpose.msra.mxu0 0.0
    %558 = vmatprep.subr.mxu0 0.0
    %559 = vmatpush2.xpose.msra.mxu0 0.0
    %560 = vmatprep.subr.mxu0 0.0
    %561 = vmatpush2.xpose.msra.mxu0 0.0
    %562 = vmatprep.subr.mxu0 0.0
    %563 = vmatpush2.xpose.msra.mxu0 0.0
    %564 = vmatprep.subr.mxu0 0.0
    %565 = vmatpush2.xpose.msra.mxu0 0.0
    %566 = vmatprep.subr.mxu0 0.0
    %567 = vmatpush2.xpose.msra.mxu0 0.0
    %568 = vmatprep.subr.mxu0 0.0
    %569 = vmatpush2.xpose.msra.mxu0 0.0
    %570 = vmatprep.mubr.f32.mxu0 0.0
    %571 = vmatmul.mubr.f32.gmra.mxu0 %v502
    %v572 = vpop.f32.mrf.mxu0
    %v573 = vadd.f32 0.0, %v572
    %v574 = vpop.f32.mrf.mxu0
    %575 = vdwg.mxu0
    %576 = vrot.lane.b32.xlu0 %v190, 96
    %v577 = vpop.permute.xlu0 %576
    %v578 = vsel %vm197, %v190, 0
    %v580 = vsel %vm197, %v577, 0
    %582 = vmatprep.subr.mxu0 0.0
    %583 = vmatpush1.xpose.msra.mxu0 0.0
    %584 = vmatprep.subr.mxu0 0.0
    %585 = vmatpush1.xpose.msra.mxu0 0.0
    %586 = vmatprep.subr.mxu0 0.0
    %587 = vmatpush1.xpose.msra.mxu0 0.0
    %588 = vmatprep.subr.mxu0 0.0
    %589 = vmatpush1.xpose.msra.mxu0 0.0
    %590 = vmatprep.subr.mxu0 0.0
    %591 = vmatpush1.xpose.msra.mxu0 0.0
    %592 = vmatprep.subr.mxu0 0.0
    %593 = vmatpush1.xpose.msra.mxu0 0.0
    %594 = vmatprep.subr.mxu0 0.0
    %595 = vmatpush1.xpose.msra.mxu0 0.0
    %596 = vmatprep.subr.mxu0 0.0
    %597 = vmatpush1.xpose.msra.mxu0 0.0
    %598 = vmatprep.subr.mxu0 0.0
    %599 = vmatpush1.xpose.msra.mxu0 0.0
    %600 = vmatprep.subr.mxu0 0.0
    %601 = vmatpush1.xpose.msra.mxu0 0.0
    %602 = vmatprep.subr.mxu0 0.0
    %603 = vmatpush1.xpose.msra.mxu0 0.0
    %604 = vmatprep.subr.mxu0 0.0
    %605 = vmatpush1.xpose.msra.mxu0 0.0
    %606 = vmatprep.subr.mxu0 0.0
    %607 = vmatpush1.xpose.msra.mxu0 0.0
    %608 = vmatprep.subr.mxu0 0.0
    %609 = vmatpush1.xpose.msra.mxu0 0.0
    %610 = vmatprep.subr.mxu0 0.0
    %611 = vmatpush1.xpose.msra.mxu0 0.0
    %612 = vmatprep.subr.mxu0 0.0
    %613 = vmatpush1.xpose.msra.mxu0 %v580
    %614 = vmatprep.subr.mxu0 0.0
    %615 = vmatpush2.xpose.msra.mxu0 0.0
    %616 = vmatprep.subr.mxu0 0.0
    %617 = vmatpush2.xpose.msra.mxu0 0.0
    %618 = vmatprep.subr.mxu0 0.0
    %619 = vmatpush2.xpose.msra.mxu0 0.0
    %620 = vmatprep.subr.mxu0 0.0
    %621 = vmatpush2.xpose.msra.mxu0 0.0
    %622 = vmatprep.subr.mxu0 0.0
    %623 = vmatpush2.xpose.msra.mxu0 0.0
    %624 = vmatprep.subr.mxu0 0.0
    %625 = vmatpush2.xpose.msra.mxu0 0.0
    %626 = vmatprep.subr.mxu0 0.0
    %627 = vmatpush2.xpose.msra.mxu0 0.0
    %628 = vmatprep.subr.mxu0 0.0
    %629 = vmatpush2.xpose.msra.mxu0 0.0
    %630 = vmatprep.subr.mxu0 0.0
    %631 = vmatpush2.xpose.msra.mxu0 0.0
    %632 = vmatprep.subr.mxu0 0.0
    %633 = vmatpush2.xpose.msra.mxu0 0.0
    %634 = vmatprep.subr.mxu0 0.0
    %635 = vmatpush2.xpose.msra.mxu0 0.0
    %636 = vmatprep.subr.mxu0 0.0
    %637 = vmatpush2.xpose.msra.mxu0 0.0
    %638 = vmatprep.subr.mxu0 0.0
    %639 = vmatpush2.xpose.msra.mxu0 0.0
    %640 = vmatprep.subr.mxu0 0.0
    %641 = vmatpush2.xpose.msra.mxu0 0.0
    %642 = vmatprep.subr.mxu0 0.0
    %643 = vmatpush2.xpose.msra.mxu0 0.0
    %644 = vmatprep.subr.mxu0 0.0
    %645 = vmatpush2.xpose.msra.mxu0 0.0
    %646 = vmatprep.mubr.f32.mxu0 0.0
    %647 = vmatmul.mubr.f32.gmra.mxu0 %v578
    %v648 = vpop.f32.mrf.mxu0
    %v649 = vadd.f32 0.0, %v648
    %v650 = vpop.f32.mrf.mxu0
    %651 = vdwg.mxu0
    %652 = vrot.lane.b32.xlu0 %v192, 96
    %v653 = vpop.permute.xlu0 %652
    %v654 = vsel %vm197, %v192, 0
    %v656 = vsel %vm197, %v653, 0
    %658 = vmatprep.subr.mxu0 0.0
    %659 = vmatpush1.xpose.msra.mxu0 0.0
    %660 = vmatprep.subr.mxu0 0.0
    %661 = vmatpush1.xpose.msra.mxu0 0.0
    %662 = vmatprep.subr.mxu0 0.0
    %663 = vmatpush1.xpose.msra.mxu0 0.0
    %664 = vmatprep.subr.mxu0 0.0
    %665 = vmatpush1.xpose.msra.mxu0 0.0
    %666 = vmatprep.subr.mxu0 0.0
    %667 = vmatpush1.xpose.msra.mxu0 0.0
    %668 = vmatprep.subr.mxu0 0.0
    %669 = vmatpush1.xpose.msra.mxu0 0.0
    %670 = vmatprep.subr.mxu0 0.0
    %671 = vmatpush1.xpose.msra.mxu0 0.0
    %672 = vmatprep.subr.mxu0 0.0
    %673 = vmatpush1.xpose.msra.mxu0 0.0
    %674 = vmatprep.subr.mxu0 0.0
    %675 = vmatpush1.xpose.msra.mxu0 0.0
    %676 = vmatprep.subr.mxu0 0.0
    %677 = vmatpush1.xpose.msra.mxu0 0.0
    %678 = vmatprep.subr.mxu0 0.0
    %679 = vmatpush1.xpose.msra.mxu0 0.0
    %680 = vmatprep.subr.mxu0 0.0
    %681 = vmatpush1.xpose.msra.mxu0 0.0
    %682 = vmatprep.subr.mxu0 0.0
    %683 = vmatpush1.xpose.msra.mxu0 0.0
    %684 = vmatprep.subr.mxu0 0.0
    %685 = vmatpush1.xpose.msra.mxu0 0.0
    %686 = vmatprep.subr.mxu0 0.0
    %687 = vmatpush1.xpose.msra.mxu0 0.0
    %688 = vmatprep.subr.mxu0 0.0
    %689 = vmatpush1.xpose.msra.mxu0 %v656
    %690 = vmatprep.subr.mxu0 0.0
    %691 = vmatpush2.xpose.msra.mxu0 0.0
    %692 = vmatprep.subr.mxu0 0.0
    %693 = vmatpush2.xpose.msra.mxu0 0.0
    %694 = vmatprep.subr.mxu0 0.0
    %695 = vmatpush2.xpose.msra.mxu0 0.0
    %696 = vmatprep.subr.mxu0 0.0
    %697 = vmatpush2.xpose.msra.mxu0 0.0
    %698 = vmatprep.subr.mxu0 0.0
    %699 = vmatpush2.xpose.msra.mxu0 0.0
    %700 = vmatprep.subr.mxu0 0.0
    %701 = vmatpush2.xpose.msra.mxu0 0.0
    %702 = vmatprep.subr.mxu0 0.0
    %703 = vmatpush2.xpose.msra.mxu0 0.0
    %704 = vmatprep.subr.mxu0 0.0
    %705 = vmatpush2.xpose.msra.mxu0 0.0
    %706 = vmatprep.subr.mxu0 0.0
    %707 = vmatpush2.xpose.msra.mxu0 0.0
    %708 = vmatprep.subr.mxu0 0.0
    %709 = vmatpush2.xpose.msra.mxu0 0.0
    %710 = vmatprep.subr.mxu0 0.0
    %711 = vmatpush2.xpose.msra.mxu0 0.0
    %712 = vmatprep.subr.mxu0 0.0
    %713 = vmatpush2.xpose.msra.mxu0 0.0
    %714 = vmatprep.subr.mxu0 0.0
    %715 = vmatpush2.xpose.msra.mxu0 0.0
    %716 = vmatprep.subr.mxu0 0.0
    %717 = vmatpush2.xpose.msra.mxu0 0.0
    %718 = vmatprep.subr.mxu0 0.0
    %719 = vmatpush2.xpose.msra.mxu0 0.0
    %720 = vmatprep.subr.mxu0 0.0
    %721 = vmatpush2.xpose.msra.mxu0 0.0
    %722 = vmatprep.mubr.f32.mxu0 0.0
    %723 = vmatmul.mubr.f32.gmra.mxu0 %v654
    %v724 = vpop.f32.mrf.mxu0
    %v725 = vadd.f32 0.0, %v724
    %v726 = vpop.f32.mrf.mxu0
    %727 = vdwg.mxu0
    %728 = vrot.lane.b32.xlu0 %v194, 96
    %v729 = vpop.permute.xlu0 %728
    %v730 = vsel %vm197, %v194, 0
    %v732 = vsel %vm197, %v729, 0
    %734 = vmatprep.subr.mxu0 0.0
    %735 = vmatpush1.xpose.msra.mxu0 0.0
    %736 = vmatprep.subr.mxu0 0.0
    %737 = vmatpush1.xpose.msra.mxu0 0.0
    %738 = vmatprep.subr.mxu0 0.0
    %739 = vmatpush1.xpose.msra.mxu0 0.0
    %740 = vmatprep.subr.mxu0 0.0
    %741 = vmatpush1.xpose.msra.mxu0 0.0
    %742 = vmatprep.subr.mxu0 0.0
    %743 = vmatpush1.xpose.msra.mxu0 0.0
    %744 = vmatprep.subr.mxu0 0.0
    %745 = vmatpush1.xpose.msra.mxu0 0.0
    %746 = vmatprep.subr.mxu0 0.0
    %747 = vmatpush1.xpose.msra.mxu0 0.0
    %748 = vmatprep.subr.mxu0 0.0
    %749 = vmatpush1.xpose.msra.mxu0 0.0
    %750 = vmatprep.subr.mxu0 0.0
    %751 = vmatpush1.xpose.msra.mxu0 0.0
    %752 = vmatprep.subr.mxu0 0.0
    %753 = vmatpush1.xpose.msra.mxu0 0.0
    %754 = vmatprep.subr.mxu0 0.0
    %755 = vmatpush1.xpose.msra.mxu0 0.0
    %756 = vmatprep.subr.mxu0 0.0
    %757 = vmatpush1.xpose.msra.mxu0 0.0
    %758 = vmatprep.subr.mxu0 0.0
    %759 = vmatpush1.xpose.msra.mxu0 0.0
    %760 = vmatprep.subr.mxu0 0.0
    %761 = vmatpush1.xpose.msra.mxu0 0.0
    %762 = vmatprep.subr.mxu0 0.0
    %763 = vmatpush1.xpose.msra.mxu0 0.0
    %764 = vmatprep.subr.mxu0 0.0
    %765 = vmatpush1.xpose.msra.mxu0 %v732
    %766 = vmatprep.subr.mxu0 0.0
    %767 = vmatpush2.xpose.msra.mxu0 0.0
    %768 = vmatprep.subr.mxu0 0.0
    %769 = vmatpush2.xpose.msra.mxu0 0.0
    %770 = vmatprep.subr.mxu0 0.0
    %771 = vmatpush2.xpose.msra.mxu0 0.0
    %772 = vmatprep.subr.mxu0 0.0
    %773 = vmatpush2.xpose.msra.mxu0 0.0
    %774 = vmatprep.subr.mxu0 0.0
    %775 = vmatpush2.xpose.msra.mxu0 0.0
    %776 = vmatprep.subr.mxu0 0.0
    %777 = vmatpush2.xpose.msra.mxu0 0.0
    %778 = vmatprep.subr.mxu0 0.0
    %779 = vmatpush2.xpose.msra.mxu0 0.0
    %780 = vmatprep.subr.mxu0 0.0
    %781 = vmatpush2.xpose.msra.mxu0 0.0
    %782 = vmatprep.subr.mxu0 0.0
    %783 = vmatpush2.xpose.msra.mxu0 0.0
    %784 = vmatprep.subr.mxu0 0.0
    %785 = vmatpush2.xpose.msra.mxu0 0.0
    %786 = vmatprep.subr.mxu0 0.0
    %787 = vmatpush2.xpose.msra.mxu0 0.0
    %788 = vmatprep.subr.mxu0 0.0
    %789 = vmatpush2.xpose.msra.mxu0 0.0
    %790 = vmatprep.subr.mxu0 0.0
    %791 = vmatpush2.xpose.msra.mxu0 0.0
    %792 = vmatprep.subr.mxu0 0.0
    %793 = vmatpush2.xpose.msra.mxu0 0.0
    %794 = vmatprep.subr.mxu0 0.0
    %795 = vmatpush2.xpose.msra.mxu0 0.0
    %796 = vmatprep.subr.mxu0 0.0
    %797 = vmatpush2.xpose.msra.mxu0 0.0
    %798 = vmatprep.mubr.f32.mxu0 0.0
    %799 = vmatmul.mubr.f32.gmra.mxu0 %v730
    %v800 = vpop.f32.mrf.mxu0
    %v801 = vadd.f32 0.0, %v800
    %v802 = vpop.f32.mrf.mxu0
    %803 = vdwg.mxu0
    %v804 = vmul.f32 %v269, 0.35355338
    %v805 = vmul.f32 %v345, 0.35355338
    %v806 = vmul.f32 %v421, 0.35355338
    %v807 = vmul.f32 %v497, 0.35355338
    %v808 = vmul.f32 %v573, 0.35355338
    %v809 = vmul.f32 %v649, 0.35355338
    %v810 = vmul.f32 %v725, 0.35355338
    %v811 = vmul.f32 %v801, 0.35355338
    %v814 = vlaneseq
    %v815 = vshrl.u32 %v814, 7
    %v816 = vsub.s32 0, %v815
    %v817 = vrot.slane %v87, %v816
    %v818 = vlaneseq
    %v819 = vshrl.u32 %v818, 7
    %v820 = vsub.s32 0, %v819
    %v821 = vrot.slane %v88, %v820
    %vm824 = vcmp.eq.f32.partialorder %v817, 0.0
    %vm825 = vcmp.eq.f32.partialorder %v821, 0.0
    %v826 = vsel %vm824, -1e+10, %v804
    %v827 = vsel %vm825, -1e+10, %v805
    %v828 = vsel %vm824, -1e+10, %v806
    %v829 = vsel %vm825, -1e+10, %v807
    %v830 = vsel %vm824, -1e+10, %v808
    %v831 = vsel %vm825, -1e+10, %v809
    %v832 = vsel %vm824, -1e+10, %v810
    %v833 = vsel %vm825, -1e+10, %v811
    %v834 = vsel %vm197, %v826, -inf
    %835 = vmax.xlane.f32.xlu0 %v834
    %v836 = vpop.xlane.xlu0 %835
    %v837 = vsel %vm197, %v827, -inf
    %838 = vmax.xlane.f32.xlu0 %v837
    %v839 = vpop.xlane.xlu0 %838
    %v840 = vsel %vm197, %v828, -inf
    %841 = vmax.xlane.f32.xlu0 %v840
    %v842 = vpop.xlane.xlu0 %841
    %v843 = vsel %vm197, %v829, -inf
    %844 = vmax.xlane.f32.xlu0 %v843
    %v845 = vpop.xlane.xlu0 %844
    %v846 = vsel %vm197, %v830, -inf
    %847 = vmax.xlane.f32.xlu0 %v846
    %v848 = vpop.xlane.xlu0 %847
    %v849 = vsel %vm197, %v831, -inf
    %850 = vmax.xlane.f32.xlu0 %v849
    %v851 = vpop.xlane.xlu0 %850
    %v852 = vsel %vm197, %v832, -inf
    %853 = vmax.xlane.f32.xlu0 %v852
    %v854 = vpop.xlane.xlu0 %853
    %v855 = vsel %vm197, %v833, -inf
    %856 = vmax.xlane.f32.xlu0 %v855
    %v857 = vpop.xlane.xlu0 %856
    %v858 = vsub.f32 %v826, %v836
    %v859 = vsub.f32 %v827, %v839
    %v860 = vsub.f32 %v828, %v842
    %v861 = vsub.f32 %v829, %v845
    %v862 = vsub.f32 %v830, %v848
    %v863 = vsub.f32 %v831, %v851
    %v864 = vsub.f32 %v832, %v854
    %v865 = vsub.f32 %v833, %v857
    %v866 = vmul.f32 %v858, 1.442695
    %v867 = vpow.pop %v866
    %v868 = vmul.f32 %v859, 1.442695
    %v869 = vpow.pop %v868
    %v870 = vmul.f32 %v860, 1.442695
    %v871 = vpow.pop %v870
    %v872 = vmul.f32 %v861, 1.442695
    %v873 = vpow.pop %v872
    %v874 = vmul.f32 %v862, 1.442695
    %v875 = vpow.pop %v874
    %v876 = vmul.f32 %v863, 1.442695
    %v877 = vpow.pop %v876
    %v878 = vmul.f32 %v864, 1.442695
    %v879 = vpow.pop %v878
    %v880 = vmul.f32 %v865, 1.442695
    %v881 = vpow.pop %v880
    %v882 = vsel %vm197, %v867, 0.0
    %883 = vadd.xlane.f32.xlu0 %v882
    %v884 = vpop.xlane.xlu0 %883
    %v885 = vsel %vm197, %v869, 0.0
    %886 = vadd.xlane.f32.xlu0 %v885
    %v887 = vpop.xlane.xlu0 %886
    %v888 = vsel %vm197, %v871, 0.0
    %889 = vadd.xlane.f32.xlu0 %v888
    %v890 = vpop.xlane.xlu0 %889
    %v891 = vsel %vm197, %v873, 0.0
    %892 = vadd.xlane.f32.xlu0 %v891
    %v893 = vpop.xlane.xlu0 %892
    %v894 = vsel %vm197, %v875, 0.0
    %895 = vadd.xlane.f32.xlu0 %v894
    %v896 = vpop.xlane.xlu0 %895
    %v897 = vsel %vm197, %v877, 0.0
    %898 = vadd.xlane.f32.xlu0 %v897
    %v899 = vpop.xlane.xlu0 %898
    %v900 = vsel %vm197, %v879, 0.0
    %901 = vadd.xlane.f32.xlu0 %v900
    %v902 = vpop.xlane.xlu0 %901
    %v903 = vsel %vm197, %v881, 0.0
    %904 = vadd.xlane.f32.xlu0 %v903
    %v905 = vpop.xlane.xlu0 %904
    %v906 = vrcp.pop %v884
    %v907 = vrcp.pop %v887
    %v908 = vrcp.pop %v890
    %v909 = vrcp.pop %v893
    %v910 = vrcp.pop %v896
    %v911 = vrcp.pop %v899
    %v912 = vrcp.pop %v902
    %v913 = vrcp.pop %v905
    %v914 = vmul.f32 %v867, %v906
    %v915 = vmul.f32 %v869, %v907
    %v916 = vmul.f32 %v871, %v908
    %v917 = vmul.f32 %v873, %v909
    %v918 = vmul.f32 %v875, %v910
    %v919 = vmul.f32 %v877, %v911
    %v920 = vmul.f32 %v879, %v912
    %v921 = vmul.f32 %v881, %v913
    %922 = vrot.lane.b32.xlu0 %v173, 64
    %v923 = vpop.permute.xlu0 %922
    %v926 = vsel %vm197, %v914, 0
    %928 = vmatprep.subr.mxu0 0.0
    %929 = vmatpush1.msra.mxu0 0.0
    %930 = vmatprep.subr.mxu0 0.0
    %931 = vmatpush1.msra.mxu0 0.0
    %932 = vmatprep.subr.mxu0 0.0
    %933 = vmatpush1.msra.mxu0 0.0
    %934 = vmatprep.subr.mxu0 0.0
    %935 = vmatpush1.msra.mxu0 0.0
    %936 = vmatprep.subr.mxu0 0.0
    %937 = vmatpush1.msra.mxu0 0.0
    %938 = vmatprep.subr.mxu0 0.0
    %939 = vmatpush1.msra.mxu0 0.0
    %940 = vmatprep.subr.mxu0 0.0
    %941 = vmatpush1.msra.mxu0 0.0
    %942 = vmatprep.subr.mxu0 0.0
    %943 = vmatpush1.msra.mxu0 0.0
    %944 = vmatprep.subr.mxu0 0.0
    %945 = vmatpush1.msra.mxu0 0.0
    %946 = vmatprep.subr.mxu0 0.0
    %947 = vmatpush1.msra.mxu0 0.0
    %948 = vmatprep.subr.mxu0 0.0
    %949 = vmatpush1.msra.mxu0 0.0
    %950 = vmatprep.subr.mxu0 0.0
    %951 = vmatpush1.msra.mxu0 0.0
    %952 = vmatprep.subr.mxu0 0.0
    %953 = vmatpush1.msra.mxu0 0.0
    %954 = vmatprep.subr.mxu0 0.0
    %955 = vmatpush1.msra.mxu0 0.0
    %956 = vmatprep.subr.mxu0 0.0
    %957 = vmatpush1.msra.mxu0 0.0
    %958 = vmatprep.subr.mxu0 0.0
    %959 = vmatpush1.msra.mxu0 %v923
    %960 = vmatprep.subr.mxu0 0.0
    %961 = vmatpush2.msra.mxu0 0.0
    %962 = vmatprep.subr.mxu0 0.0
    %963 = vmatpush2.msra.mxu0 0.0
    %964 = vmatprep.subr.mxu0 0.0
    %965 = vmatpush2.msra.mxu0 0.0
    %966 = vmatprep.subr.mxu0 0.0
    %967 = vmatpush2.msra.mxu0 0.0
    %968 = vmatprep.subr.mxu0 0.0
    %969 = vmatpush2.msra.mxu0 0.0
    %970 = vmatprep.subr.mxu0 0.0
    %971 = vmatpush2.msra.mxu0 0.0
    %972 = vmatprep.subr.mxu0 0.0
    %973 = vmatpush2.msra.mxu0 0.0
    %974 = vmatprep.subr.mxu0 0.0
    %975 = vmatpush2.msra.mxu0 0.0
    %976 = vmatprep.subr.mxu0 0.0
    %977 = vmatpush2.msra.mxu0 0.0
    %978 = vmatprep.subr.mxu0 0.0
    %979 = vmatpush2.msra.mxu0 0.0
    %980 = vmatprep.subr.mxu0 0.0
    %981 = vmatpush2.msra.mxu0 0.0
    %982 = vmatprep.subr.mxu0 0.0
    %983 = vmatpush2.msra.mxu0 0.0
    %984 = vmatprep.subr.mxu0 0.0
    %985 = vmatpush2.msra.mxu0 0.0
    %986 = vmatprep.subr.mxu0 0.0
    %987 = vmatpush2.msra.mxu0 0.0
    %988 = vmatprep.subr.mxu0 0.0
    %989 = vmatpush2.msra.mxu0 0.0
    %990 = vmatprep.subr.mxu0 0.0
    %991 = vmatpush2.msra.mxu0 0.0
    %992 = vmatprep.mubr.f32.mxu0 0.0
    %993 = vmatmul.mubr.f32.gmra.mxu0 %v926
    %v994 = vpop.f32.mrf.mxu0
    %v995 = vadd.f32 0.0, %v994
    %v996 = vpop.f32.mrf.mxu0
    %997 = vdwg.mxu0
    %998 = vrot.lane.b32.xlu0 %v178, 64
    %v999 = vpop.permute.xlu0 %998
    %v1002 = vsel %vm197, %v915, 0
    %1004 = vmatprep.subr.mxu0 0.0
    %1005 = vmatpush1.msra.mxu0 0.0
    %1006 = vmatprep.subr.mxu0 0.0
    %1007 = vmatpush1.msra.mxu0 0.0
    %1008 = vmatprep.subr.mxu0 0.0
    %1009 = vmatpush1.msra.mxu0 0.0
    %1010 = vmatprep.subr.mxu0 0.0
    %1011 = vmatpush1.msra.mxu0 0.0
    %1012 = vmatprep.subr.mxu0 0.0
    %1013 = vmatpush1.msra.mxu0 0.0
    %1014 = vmatprep.subr.mxu0 0.0
    %1015 = vmatpush1.msra.mxu0 0.0
    %1016 = vmatprep.subr.mxu0 0.0
    %1017 = vmatpush1.msra.mxu0 0.0
    %1018 = vmatprep.subr.mxu0 0.0
    %1019 = vmatpush1.msra.mxu0 0.0
    %1020 = vmatprep.subr.mxu0 0.0
    %1021 = vmatpush1.msra.mxu0 0.0
    %1022 = vmatprep.subr.mxu0 0.0
    %1023 = vmatpush1.msra.mxu0 0.0
    %1024 = vmatprep.subr.mxu0 0.0
    %1025 = vmatpush1.msra.mxu0 0.0
    %1026 = vmatprep.subr.mxu0 0.0
    %1027 = vmatpush1.msra.mxu0 0.0
    %1028 = vmatprep.subr.mxu0 0.0
    %1029 = vmatpush1.msra.mxu0 0.0
    %1030 = vmatprep.subr.mxu0 0.0
    %1031 = vmatpush1.msra.mxu0 0.0
    %1032 = vmatprep.subr.mxu0 0.0
    %1033 = vmatpush1.msra.mxu0 0.0
    %1034 = vmatprep.subr.mxu0 0.0
    %1035 = vmatpush1.msra.mxu0 %v999
    %1036 = vmatprep.subr.mxu0 0.0
    %1037 = vmatpush2.msra.mxu0 0.0
    %1038 = vmatprep.subr.mxu0 0.0
    %1039 = vmatpush2.msra.mxu0 0.0
    %1040 = vmatprep.subr.mxu0 0.0
    %1041 = vmatpush2.msra.mxu0 0.0
    %1042 = vmatprep.subr.mxu0 0.0
    %1043 = vmatpush2.msra.mxu0 0.0
    %1044 = vmatprep.subr.mxu0 0.0
    %1045 = vmatpush2.msra.mxu0 0.0
    %1046 = vmatprep.subr.mxu0 0.0
    %1047 = vmatpush2.msra.mxu0 0.0
    %1048 = vmatprep.subr.mxu0 0.0
    %1049 = vmatpush2.msra.mxu0 0.0
    %1050 = vmatprep.subr.mxu0 0.0
    %1051 = vmatpush2.msra.mxu0 0.0
    %1052 = vmatprep.subr.mxu0 0.0
    %1053 = vmatpush2.msra.mxu0 0.0
    %1054 = vmatprep.subr.mxu0 0.0
    %1055 = vmatpush2.msra.mxu0 0.0
    %1056 = vmatprep.subr.mxu0 0.0
    %1057 = vmatpush2.msra.mxu0 0.0
    %1058 = vmatprep.subr.mxu0 0.0
    %1059 = vmatpush2.msra.mxu0 0.0
    %1060 = vmatprep.subr.mxu0 0.0
    %1061 = vmatpush2.msra.mxu0 0.0
    %1062 = vmatprep.subr.mxu0 0.0
    %1063 = vmatpush2.msra.mxu0 0.0
    %1064 = vmatprep.subr.mxu0 0.0
    %1065 = vmatpush2.msra.mxu0 0.0
    %1066 = vmatprep.subr.mxu0 0.0
    %1067 = vmatpush2.msra.mxu0 0.0
    %1068 = vmatprep.mubr.f32.mxu0 0.0
    %1069 = vmatmul.mubr.f32.gmra.mxu0 %v1002
    %v1070 = vpop.f32.mrf.mxu0
    %v1071 = vadd.f32 0.0, %v1070
    %v1072 = vpop.f32.mrf.mxu0
    %1073 = vdwg.mxu0
    %1074 = vrot.lane.b32.xlu0 %v184, 64
    %v1075 = vpop.permute.xlu0 %1074
    %v1078 = vsel %vm197, %v916, 0
    %1080 = vmatprep.subr.mxu0 0.0
    %1081 = vmatpush1.msra.mxu0 0.0
    %1082 = vmatprep.subr.mxu0 0.0
    %1083 = vmatpush1.msra.mxu0 0.0
    %1084 = vmatprep.subr.mxu0 0.0
    %1085 = vmatpush1.msra.mxu0 0.0
    %1086 = vmatprep.subr.mxu0 0.0
    %1087 = vmatpush1.msra.mxu0 0.0
    %1088 = vmatprep.subr.mxu0 0.0
    %1089 = vmatpush1.msra.mxu0 0.0
    %1090 = vmatprep.subr.mxu0 0.0
    %1091 = vmatpush1.msra.mxu0 0.0
    %1092 = vmatprep.subr.mxu0 0.0
    %1093 = vmatpush1.msra.mxu0 0.0
    %1094 = vmatprep.subr.mxu0 0.0
    %1095 = vmatpush1.msra.mxu0 0.0
    %1096 = vmatprep.subr.mxu0 0.0
    %1097 = vmatpush1.msra.mxu0 0.0
    %1098 = vmatprep.subr.mxu0 0.0
    %1099 = vmatpush1.msra.mxu0 0.0
    %1100 = vmatprep.subr.mxu0 0.0
    %1101 = vmatpush1.msra.mxu0 0.0
    %1102 = vmatprep.subr.mxu0 0.0
    %1103 = vmatpush1.msra.mxu0 0.0
    %1104 = vmatprep.subr.mxu0 0.0
    %1105 = vmatpush1.msra.mxu0 0.0
    %1106 = vmatprep.subr.mxu0 0.0
    %1107 = vmatpush1.msra.mxu0 0.0
    %1108 = vmatprep.subr.mxu0 0.0
    %1109 = vmatpush1.msra.mxu0 0.0
    %1110 = vmatprep.subr.mxu0 0.0
    %1111 = vmatpush1.msra.mxu0 %v1075
    %1112 = vmatprep.subr.mxu0 0.0
    %1113 = vmatpush2.msra.mxu0 0.0
    %1114 = vmatprep.subr.mxu0 0.0
    %1115 = vmatpush2.msra.mxu0 0.0
    %1116 = vmatprep.subr.mxu0 0.0
    %1117 = vmatpush2.msra.mxu0 0.0
    %1118 = vmatprep.subr.mxu0 0.0
    %1119 = vmatpush2.msra.mxu0 0.0
    %1120 = vmatprep.subr.mxu0 0.0
    %1121 = vmatpush2.msra.mxu0 0.0
    %1122 = vmatprep.subr.mxu0 0.0
    %1123 = vmatpush2.msra.mxu0 0.0
    %1124 = vmatprep.subr.mxu0 0.0
    %1125 = vmatpush2.msra.mxu0 0.0
    %1126 = vmatprep.subr.mxu0 0.0
    %1127 = vmatpush2.msra.mxu0 0.0
    %1128 = vmatprep.subr.mxu0 0.0
    %1129 = vmatpush2.msra.mxu0 0.0
    %1130 = vmatprep.subr.mxu0 0.0
    %1131 = vmatpush2.msra.mxu0 0.0
    %1132 = vmatprep.subr.mxu0 0.0
    %1133 = vmatpush2.msra.mxu0 0.0
    %1134 = vmatprep.subr.mxu0 0.0
    %1135 = vmatpush2.msra.mxu0 0.0
    %1136 = vmatprep.subr.mxu0 0.0
    %1137 = vmatpush2.msra.mxu0 0.0
    %1138 = vmatprep.subr.mxu0 0.0
    %1139 = vmatpush2.msra.mxu0 0.0
    %1140 = vmatprep.subr.mxu0 0.0
    %1141 = vmatpush2.msra.mxu0 0.0
    %1142 = vmatprep.subr.mxu0 0.0
    %1143 = vmatpush2.msra.mxu0 0.0
    %1144 = vmatprep.mubr.f32.mxu0 0.0
    %1145 = vmatmul.mubr.f32.gmra.mxu0 %v1078
    %v1146 = vpop.f32.mrf.mxu0
    %v1147 = vadd.f32 0.0, %v1146
    %v1148 = vpop.f32.mrf.mxu0
    %1149 = vdwg.mxu0
    %1150 = vrot.lane.b32.xlu0 %v186, 64
    %v1151 = vpop.permute.xlu0 %1150
    %v1154 = vsel %vm197, %v917, 0
    %1156 = vmatprep.subr.mxu0 0.0
    %1157 = vmatpush1.msra.mxu0 0.0
    %1158 = vmatprep.subr.mxu0 0.0
    %1159 = vmatpush1.msra.mxu0 0.0
    %1160 = vmatprep.subr.mxu0 0.0
    %1161 = vmatpush1.msra.mxu0 0.0
    %1162 = vmatprep.subr.mxu0 0.0
    %1163 = vmatpush1.msra.mxu0 0.0
    %1164 = vmatprep.subr.mxu0 0.0
    %1165 = vmatpush1.msra.mxu0 0.0
    %1166 = vmatprep.subr.mxu0 0.0
    %1167 = vmatpush1.msra.mxu0 0.0
    %1168 = vmatprep.subr.mxu0 0.0
    %1169 = vmatpush1.msra.mxu0 0.0
    %1170 = vmatprep.subr.mxu0 0.0
    %1171 = vmatpush1.msra.mxu0 0.0
    %1172 = vmatprep.subr.mxu0 0.0
    %1173 = vmatpush1.msra.mxu0 0.0
    %1174 = vmatprep.subr.mxu0 0.0
    %1175 = vmatpush1.msra.mxu0 0.0
    %1176 = vmatprep.subr.mxu0 0.0
    %1177 = vmatpush1.msra.mxu0 0.0
    %1178 = vmatprep.subr.mxu0 0.0
    %1179 = vmatpush1.msra.mxu0 0.0
    %1180 = vmatprep.subr.mxu0 0.0
    %1181 = vmatpush1.msra.mxu0 0.0
    %1182 = vmatprep.subr.mxu0 0.0
    %1183 = vmatpush1.msra.mxu0 0.0
    %1184 = vmatprep.subr.mxu0 0.0
    %1185 = vmatpush1.msra.mxu0 0.0
    %1186 = vmatprep.subr.mxu0 0.0
    %1187 = vmatpush1.msra.mxu0 %v1151
    %1188 = vmatprep.subr.mxu0 0.0
    %1189 = vmatpush2.msra.mxu0 0.0
    %1190 = vmatprep.subr.mxu0 0.0
    %1191 = vmatpush2.msra.mxu0 0.0
    %1192 = vmatprep.subr.mxu0 0.0
    %1193 = vmatpush2.msra.mxu0 0.0
    %1194 = vmatprep.subr.mxu0 0.0
    %1195 = vmatpush2.msra.mxu0 0.0
    %1196 = vmatprep.subr.mxu0 0.0
    %1197 = vmatpush2.msra.mxu0 0.0
    %1198 = vmatprep.subr.mxu0 0.0
    %1199 = vmatpush2.msra.mxu0 0.0
    %1200 = vmatprep.subr.mxu0 0.0
    %1201 = vmatpush2.msra.mxu0 0.0
    %1202 = vmatprep.subr.mxu0 0.0
    %1203 = vmatpush2.msra.mxu0 0.0
    %1204 = vmatprep.subr.mxu0 0.0
    %1205 = vmatpush2.msra.mxu0 0.0
    %1206 = vmatprep.subr.mxu0 0.0
    %1207 = vmatpush2.msra.mxu0 0.0
    %1208 = vmatprep.subr.mxu0 0.0
    %1209 = vmatpush2.msra.mxu0 0.0
    %1210 = vmatprep.subr.mxu0 0.0
    %1211 = vmatpush2.msra.mxu0 0.0
    %1212 = vmatprep.subr.mxu0 0.0
    %1213 = vmatpush2.msra.mxu0 0.0
    %1214 = vmatprep.subr.mxu0 0.0
    %1215 = vmatpush2.msra.mxu0 0.0
    %1216 = vmatprep.subr.mxu0 0.0
    %1217 = vmatpush2.msra.mxu0 0.0
    %1218 = vmatprep.subr.mxu0 0.0
    %1219 = vmatpush2.msra.mxu0 0.0
    %1220 = vmatprep.mubr.f32.mxu0 0.0
    %1221 = vmatmul.mubr.f32.gmra.mxu0 %v1154
    %v1222 = vpop.f32.mrf.mxu0
    %v1223 = vadd.f32 0.0, %v1222
    %v1224 = vpop.f32.mrf.mxu0
    %1225 = vdwg.mxu0
    %1226 = vrot.lane.b32.xlu0 %v188, 64
    %v1227 = vpop.permute.xlu0 %1226
    %v1230 = vsel %vm197, %v918, 0
    %1232 = vmatprep.subr.mxu0 0.0
    %1233 = vmatpush1.msra.mxu0 0.0
    %1234 = vmatprep.subr.mxu0 0.0
    %1235 = vmatpush1.msra.mxu0 0.0
    %1236 = vmatprep.subr.mxu0 0.0
    %1237 = vmatpush1.msra.mxu0 0.0
    %1238 = vmatprep.subr.mxu0 0.0
    %1239 = vmatpush1.msra.mxu0 0.0
    %1240 = vmatprep.subr.mxu0 0.0
    %1241 = vmatpush1.msra.mxu0 0.0
    %1242 = vmatprep.subr.mxu0 0.0
    %1243 = vmatpush1.msra.mxu0 0.0
    %1244 = vmatprep.subr.mxu0 0.0
    %1245 = vmatpush1.msra.mxu0 0.0
    %1246 = vmatprep.subr.mxu0 0.0
    %1247 = vmatpush1.msra.mxu0 0.0
    %1248 = vmatprep.subr.mxu0 0.0
    %1249 = vmatpush1.msra.mxu0 0.0
    %1250 = vmatprep.subr.mxu0 0.0
    %1251 = vmatpush1.msra.mxu0 0.0
    %1252 = vmatprep.subr.mxu0 0.0
    %1253 = vmatpush1.msra.mxu0 0.0
    %1254 = vmatprep.subr.mxu0 0.0
    %1255 = vmatpush1.msra.mxu0 0.0
    %1256 = vmatprep.subr.mxu0 0.0
    %1257 = vmatpush1.msra.mxu0 0.0
    %1258 = vmatprep.subr.mxu0 0.0
    %1259 = vmatpush1.msra.mxu0 0.0
    %1260 = vmatprep.subr.mxu0 0.0
    %1261 = vmatpush1.msra.mxu0 0.0
    %1262 = vmatprep.subr.mxu0 0.0
    %1263 = vmatpush1.msra.mxu0 %v1227
    %1264 = vmatprep.subr.mxu0 0.0
    %1265 = vmatpush2.msra.mxu0 0.0
    %1266 = vmatprep.subr.mxu0 0.0
    %1267 = vmatpush2.msra.mxu0 0.0
    %1268 = vmatprep.subr.mxu0 0.0
    %1269 = vmatpush2.msra.mxu0 0.0
    %1270 = vmatprep.subr.mxu0 0.0
    %1271 = vmatpush2.msra.mxu0 0.0
    %1272 = vmatprep.subr.mxu0 0.0
    %1273 = vmatpush2.msra.mxu0 0.0
    %1274 = vmatprep.subr.mxu0 0.0
    %1275 = vmatpush2.msra.mxu0 0.0
    %1276 = vmatprep.subr.mxu0 0.0
    %1277 = vmatpush2.msra.mxu0 0.0
    %1278 = vmatprep.subr.mxu0 0.0
    %1279 = vmatpush2.msra.mxu0 0.0
    %1280 = vmatprep.subr.mxu0 0.0
    %1281 = vmatpush2.msra.mxu0 0.0
    %1282 = vmatprep.subr.mxu0 0.0
    %1283 = vmatpush2.msra.mxu0 0.0
    %1284 = vmatprep.subr.mxu0 0.0
    %1285 = vmatpush2.msra.mxu0 0.0
    %1286 = vmatprep.subr.mxu0 0.0
    %1287 = vmatpush2.msra.mxu0 0.0
    %1288 = vmatprep.subr.mxu0 0.0
    %1289 = vmatpush2.msra.mxu0 0.0
    %1290 = vmatprep.subr.mxu0 0.0
    %1291 = vmatpush2.msra.mxu0 0.0
    %1292 = vmatprep.subr.mxu0 0.0
    %1293 = vmatpush2.msra.mxu0 0.0
    %1294 = vmatprep.subr.mxu0 0.0
    %1295 = vmatpush2.msra.mxu0 0.0
    %1296 = vmatprep.mubr.f32.mxu0 0.0
    %1297 = vmatmul.mubr.f32.gmra.mxu0 %v1230
    %v1298 = vpop.f32.mrf.mxu0
    %v1299 = vadd.f32 0.0, %v1298
    %v1300 = vpop.f32.mrf.mxu0
    %1301 = vdwg.mxu0
    %1302 = vrot.lane.b32.xlu0 %v190, 64
    %v1303 = vpop.permute.xlu0 %1302
    %v1306 = vsel %vm197, %v919, 0
    %1308 = vmatprep.subr.mxu0 0.0
    %1309 = vmatpush1.msra.mxu0 0.0
    %1310 = vmatprep.subr.mxu0 0.0
    %1311 = vmatpush1.msra.mxu0 0.0
    %1312 = vmatprep.subr.mxu0 0.0
    %1313 = vmatpush1.msra.mxu0 0.0
    %1314 = vmatprep.subr.mxu0 0.0
    %1315 = vmatpush1.msra.mxu0 0.0
    %1316 = vmatprep.subr.mxu0 0.0
    %1317 = vmatpush1.msra.mxu0 0.0
    %1318 = vmatprep.subr.mxu0 0.0
    %1319 = vmatpush1.msra.mxu0 0.0
    %1320 = vmatprep.subr.mxu0 0.0
    %1321 = vmatpush1.msra.mxu0 0.0
    %1322 = vmatprep.subr.mxu0 0.0
    %1323 = vmatpush1.msra.mxu0 0.0
    %1324 = vmatprep.subr.mxu0 0.0
    %1325 = vmatpush1.msra.mxu0 0.0
    %1326 = vmatprep.subr.mxu0 0.0
    %1327 = vmatpush1.msra.mxu0 0.0
    %1328 = vmatprep.subr.mxu0 0.0
    %1329 = vmatpush1.msra.mxu0 0.0
    %1330 = vmatprep.subr.mxu0 0.0
    %1331 = vmatpush1.msra.mxu0 0.0
    %1332 = vmatprep.subr.mxu0 0.0
    %1333 = vmatpush1.msra.mxu0 0.0
    %1334 = vmatprep.subr.mxu0 0.0
    %1335 = vmatpush1.msra.mxu0 0.0
    %1336 = vmatprep.subr.mxu0 0.0
    %1337 = vmatpush1.msra.mxu0 0.0
    %1338 = vmatprep.subr.mxu0 0.0
    %1339 = vmatpush1.msra.mxu0 %v1303
    %1340 = vmatprep.subr.mxu0 0.0
    %1341 = vmatpush2.msra.mxu0 0.0
    %1342 = vmatprep.subr.mxu0 0.0
    %1343 = vmatpush2.msra.mxu0 0.0
    %1344 = vmatprep.subr.mxu0 0.0
    %1345 = vmatpush2.msra.mxu0 0.0
    %1346 = vmatprep.subr.mxu0 0.0
    %1347 = vmatpush2.msra.mxu0 0.0
    %1348 = vmatprep.subr.mxu0 0.0
    %1349 = vmatpush2.msra.mxu0 0.0
    %1350 = vmatprep.subr.mxu0 0.0
    %1351 = vmatpush2.msra.mxu0 0.0
    %1352 = vmatprep.subr.mxu0 0.0
    %1353 = vmatpush2.msra.mxu0 0.0
    %1354 = vmatprep.subr.mxu0 0.0
    %1355 = vmatpush2.msra.mxu0 0.0
    %1356 = vmatprep.subr.mxu0 0.0
    %1357 = vmatpush2.msra.mxu0 0.0
    %1358 = vmatprep.subr.mxu0 0.0
    %1359 = vmatpush2.msra.mxu0 0.0
    %1360 = vmatprep.subr.mxu0 0.0
    %1361 = vmatpush2.msra.mxu0 0.0
    %1362 = vmatprep.subr.mxu0 0.0
    %1363 = vmatpush2.msra.mxu0 0.0
    %1364 = vmatprep.subr.mxu0 0.0
    %1365 = vmatpush2.msra.mxu0 0.0
    %1366 = vmatprep.subr.mxu0 0.0
    %1367 = vmatpush2.msra.mxu0 0.0
    %1368 = vmatprep.subr.mxu0 0.0
    %1369 = vmatpush2.msra.mxu0 0.0
    %1370 = vmatprep.subr.mxu0 0.0
    %1371 = vmatpush2.msra.mxu0 0.0
    %1372 = vmatprep.mubr.f32.mxu0 0.0
    %1373 = vmatmul.mubr.f32.gmra.mxu0 %v1306
    %v1374 = vpop.f32.mrf.mxu0
    %v1375 = vadd.f32 0.0, %v1374
    %v1376 = vpop.f32.mrf.mxu0
    %1377 = vdwg.mxu0
    %1378 = vrot.lane.b32.xlu0 %v192, 64
    %v1379 = vpop.permute.xlu0 %1378
    %v1382 = vsel %vm197, %v920, 0
    %1384 = vmatprep.subr.mxu0 0.0
    %1385 = vmatpush1.msra.mxu0 0.0
    %1386 = vmatprep.subr.mxu0 0.0
    %1387 = vmatpush1.msra.mxu0 0.0
    %1388 = vmatprep.subr.mxu0 0.0
    %1389 = vmatpush1.msra.mxu0 0.0
    %1390 = vmatprep.subr.mxu0 0.0
    %1391 = vmatpush1.msra.mxu0 0.0
    %1392 = vmatprep.subr.mxu0 0.0
    %1393 = vmatpush1.msra.mxu0 0.0
    %1394 = vmatprep.subr.mxu0 0.0
    %1395 = vmatpush1.msra.mxu0 0.0
    %1396 = vmatprep.subr.mxu0 0.0
    %1397 = vmatpush1.msra.mxu0 0.0
    %1398 = vmatprep.subr.mxu0 0.0
    %1399 = vmatpush1.msra.mxu0 0.0
    %1400 = vmatprep.subr.mxu0 0.0
    %1401 = vmatpush1.msra.mxu0 0.0
    %1402 = vmatprep.subr.mxu0 0.0
    %1403 = vmatpush1.msra.mxu0 0.0
    %1404 = vmatprep.subr.mxu0 0.0
    %1405 = vmatpush1.msra.mxu0 0.0
    %1406 = vmatprep.subr.mxu0 0.0
    %1407 = vmatpush1.msra.mxu0 0.0
    %1408 = vmatprep.subr.mxu0 0.0
    %1409 = vmatpush1.msra.mxu0 0.0
    %1410 = vmatprep.subr.mxu0 0.0
    %1411 = vmatpush1.msra.mxu0 0.0
    %1412 = vmatprep.subr.mxu0 0.0
    %1413 = vmatpush1.msra.mxu0 0.0
    %1414 = vmatprep.subr.mxu0 0.0
    %1415 = vmatpush1.msra.mxu0 %v1379
    %1416 = vmatprep.subr.mxu0 0.0
    %1417 = vmatpush2.msra.mxu0 0.0
    %1418 = vmatprep.subr.mxu0 0.0
    %1419 = vmatpush2.msra.mxu0 0.0
    %1420 = vmatprep.subr.mxu0 0.0
    %1421 = vmatpush2.msra.mxu0 0.0
    %1422 = vmatprep.subr.mxu0 0.0
    %1423 = vmatpush2.msra.mxu0 0.0
    %1424 = vmatprep.subr.mxu0 0.0
    %1425 = vmatpush2.msra.mxu0 0.0
    %1426 = vmatprep.subr.mxu0 0.0
    %1427 = vmatpush2.msra.mxu0 0.0
    %1428 = vmatprep.subr.mxu0 0.0
    %1429 = vmatpush2.msra.mxu0 0.0
    %1430 = vmatprep.subr.mxu0 0.0
    %1431 = vmatpush2.msra.mxu0 0.0
    %1432 = vmatprep.subr.mxu0 0.0
    %1433 = vmatpush2.msra.mxu0 0.0
    %1434 = vmatprep.subr.mxu0 0.0
    %1435 = vmatpush2.msra.mxu0 0.0
    %1436 = vmatprep.subr.mxu0 0.0
    %1437 = vmatpush2.msra.mxu0 0.0
    %1438 = vmatprep.subr.mxu0 0.0
    %1439 = vmatpush2.msra.mxu0 0.0
    %1440 = vmatprep.subr.mxu0 0.0
    %1441 = vmatpush2.msra.mxu0 0.0
    %1442 = vmatprep.subr.mxu0 0.0
    %1443 = vmatpush2.msra.mxu0 0.0
    %1444 = vmatprep.subr.mxu0 0.0
    %1445 = vmatpush2.msra.mxu0 0.0
    %1446 = vmatprep.subr.mxu0 0.0
    %1447 = vmatpush2.msra.mxu0 0.0
    %1448 = vmatprep.mubr.f32.mxu0 0.0
    %1449 = vmatmul.mubr.f32.gmra.mxu0 %v1382
    %v1450 = vpop.f32.mrf.mxu0
    %v1451 = vadd.f32 0.0, %v1450
    %v1452 = vpop.f32.mrf.mxu0
    %1453 = vdwg.mxu0
    %1454 = vrot.lane.b32.xlu0 %v194, 64
    %v1455 = vpop.permute.xlu0 %1454
    %v1458 = vsel %vm197, %v921, 0
    %1460 = vmatprep.subr.mxu0 0.0
    %1461 = vmatpush1.msra.mxu0 0.0
    %1462 = vmatprep.subr.mxu0 0.0
    %1463 = vmatpush1.msra.mxu0 0.0
    %1464 = vmatprep.subr.mxu0 0.0
    %1465 = vmatpush1.msra.mxu0 0.0
    %1466 = vmatprep.subr.mxu0 0.0
    %1467 = vmatpush1.msra.mxu0 0.0
    %1468 = vmatprep.subr.mxu0 0.0
    %1469 = vmatpush1.msra.mxu0 0.0
    %1470 = vmatprep.subr.mxu0 0.0
    %1471 = vmatpush1.msra.mxu0 0.0
    %1472 = vmatprep.subr.mxu0 0.0
    %1473 = vmatpush1.msra.mxu0 0.0
    %1474 = vmatprep.subr.mxu0 0.0
    %1475 = vmatpush1.msra.mxu0 0.0
    %1476 = vmatprep.subr.mxu0 0.0
    %1477 = vmatpush1.msra.mxu0 0.0
    %1478 = vmatprep.subr.mxu0 0.0
    %1479 = vmatpush1.msra.mxu0 0.0
    %1480 = vmatprep.subr.mxu0 0.0
    %1481 = vmatpush1.msra.mxu0 0.0
    %1482 = vmatprep.subr.mxu0 0.0
    %1483 = vmatpush1.msra.mxu0 0.0
    %1484 = vmatprep.subr.mxu0 0.0
    %1485 = vmatpush1.msra.mxu0 0.0
    %1486 = vmatprep.subr.mxu0 0.0
    %1487 = vmatpush1.msra.mxu0 0.0
    %1488 = vmatprep.subr.mxu0 0.0
    %1489 = vmatpush1.msra.mxu0 0.0
    %1490 = vmatprep.subr.mxu0 0.0
    %1491 = vmatpush1.msra.mxu0 %v1455
    %1492 = vmatprep.subr.mxu0 0.0
    %1493 = vmatpush2.msra.mxu0 0.0
    %1494 = vmatprep.subr.mxu0 0.0
    %1495 = vmatpush2.msra.mxu0 0.0
    %1496 = vmatprep.subr.mxu0 0.0
    %1497 = vmatpush2.msra.mxu0 0.0
    %1498 = vmatprep.subr.mxu0 0.0
    %1499 = vmatpush2.msra.mxu0 0.0
    %1500 = vmatprep.subr.mxu0 0.0
    %1501 = vmatpush2.msra.mxu0 0.0
    %1502 = vmatprep.subr.mxu0 0.0
    %1503 = vmatpush2.msra.mxu0 0.0
    %1504 = vmatprep.subr.mxu0 0.0
    %1505 = vmatpush2.msra.mxu0 0.0
    %1506 = vmatprep.subr.mxu0 0.0
    %1507 = vmatpush2.msra.mxu0 0.0
    %1508 = vmatprep.subr.mxu0 0.0
    %1509 = vmatpush2.msra.mxu0 0.0
    %1510 = vmatprep.subr.mxu0 0.0
    %1511 = vmatpush2.msra.mxu0 0.0
    %1512 = vmatprep.subr.mxu0 0.0
    %1513 = vmatpush2.msra.mxu0 0.0
    %1514 = vmatprep.subr.mxu0 0.0
    %1515 = vmatpush2.msra.mxu0 0.0
    %1516 = vmatprep.subr.mxu0 0.0
    %1517 = vmatpush2.msra.mxu0 0.0
    %1518 = vmatprep.subr.mxu0 0.0
    %1519 = vmatpush2.msra.mxu0 0.0
    %1520 = vmatprep.subr.mxu0 0.0
    %1521 = vmatpush2.msra.mxu0 0.0
    %1522 = vmatprep.subr.mxu0 0.0
    %1523 = vmatpush2.msra.mxu0 0.0
    %1524 = vmatprep.mubr.f32.mxu0 0.0
    %1525 = vmatmul.mubr.f32.gmra.mxu0 %v1458
    %v1526 = vpop.f32.mrf.mxu0
    %v1527 = vadd.f32 0.0, %v1526
    %v1528 = vpop.f32.mrf.mxu0
    %1529 = vdwg.mxu0
    %1532 = vrot.lane.b32.xlu0 %v1147, 8
    %v1533 = vpop.permute.xlu0 %1532
    %1534 = vrot.lane.b32.xlu0 %v1223, 8
    %v1535 = vpop.permute.xlu0 %1534
    %1540 = vrot.lane.b32.xlu0 %v1299, 16
    %v1541 = vpop.permute.xlu0 %1540
    %1542 = vrot.lane.b32.xlu0 %v1375, 16
    %v1543 = vpop.permute.xlu0 %1542
    %1548 = vrot.lane.b32.xlu0 %v1451, 24
    %v1549 = vpop.permute.xlu0 %1548
    %1550 = vrot.lane.b32.xlu0 %v1527, 24
    %v1551 = vpop.permute.xlu0 %1550
    %v1554 = vsel %vm197, %v995, %v1533
    %v1555 = vsel %vm197, %v1071, %v1535
    %vm1556 = vcmask 130048
    %v1557 = vsel %vm1556, %v1554, %v1541
    %v1558 = vsel %vm1556, %v1555, %v1543
    %vm1559 = vcmask 195584
    %v1560 = vsel %vm1559, %v1557, %v1549
    %v1561 = vsel %vm1559, %v1558, %v1551
    %v1562 = vld [vmem:[#allocation5] sm:$0xff]
    %v1563 = vld [vmem:[#allocation5 + $0x8] sm:$0xff]
    %v1564 = vld [vmem:[#allocation5 + $0x10] sm:$0xff]
    %v1565 = vld [vmem:[#allocation5 + $0x18] sm:$0xff]
    %v1566 = vlaneseq
    %v1567 = vshrl.u32 %v1566, 7
    %v1568 = vsub.s32 1, %v1567
    %v1569 = vrot.slane %v89, %v1568
    %v1571 = vsel %vm99, %v1560, 0
    %v1574 = vsel %vm99, %v1561, 0
    %1576 = vmatprep.subr.mxu0 0.0
    %1577 = vmatpush1.msra.mxu0 0.0
    %1578 = vmatprep.subr.mxu0 0.0
    %1579 = vmatpush1.msra.mxu0 0.0
    %1580 = vmatprep.subr.mxu0 0.0
    %1581 = vmatpush1.msra.mxu0 0.0
    %1582 = vmatprep.subr.mxu0 0.0
    %1583 = vmatpush1.msra.mxu0 0.0
    %1584 = vmatprep.subr.mxu0 0.0
    %1585 = vmatpush1.msra.mxu0 0.0
    %1586 = vmatprep.subr.mxu0 0.0
    %1587 = vmatpush1.msra.mxu0 0.0
    %1588 = vmatprep.subr.mxu0 0.0
    %1589 = vmatpush1.msra.mxu0 0.0
    %1590 = vmatprep.subr.mxu0 0.0
    %1591 = vmatpush1.msra.mxu0 0.0
    %1592 = vmatprep.subr.mxu0 0.0
    %1593 = vmatpush1.msra.mxu0 0.0
    %1594 = vmatprep.subr.mxu0 0.0
    %1595 = vmatpush1.msra.mxu0 0.0
    %1596 = vmatprep.subr.mxu0 0.0
    %1597 = vmatpush1.msra.mxu0 0.0
    %1598 = vmatprep.subr.mxu0 0.0
    %1599 = vmatpush1.msra.mxu0 0.0
    %1600 = vmatprep.subr.mxu0 0.0
    %1601 = vmatpush1.msra.mxu0 %v1565
    %1602 = vmatprep.subr.mxu0 0.0
    %1603 = vmatpush1.msra.mxu0 %v1564
    %1604 = vmatprep.subr.mxu0 0.0
    %1605 = vmatpush1.msra.mxu0 %v1563
    %1606 = vmatprep.subr.mxu0 0.0
    %1607 = vmatpush1.msra.mxu0 %v1562
    %1608 = vmatprep.subr.mxu0 0.0
    %1609 = vmatpush2.msra.mxu0 0.0
    %1610 = vmatprep.subr.mxu0 0.0
    %1611 = vmatpush2.msra.mxu0 0.0
    %1612 = vmatprep.subr.mxu0 0.0
    %1613 = vmatpush2.msra.mxu0 0.0
    %1614 = vmatprep.subr.mxu0 0.0
    %1615 = vmatpush2.msra.mxu0 0.0
    %1616 = vmatprep.subr.mxu0 0.0
    %1617 = vmatpush2.msra.mxu0 0.0
    %1618 = vmatprep.subr.mxu0 0.0
    %1619 = vmatpush2.msra.mxu0 0.0
    %1620 = vmatprep.subr.mxu0 0.0
    %1621 = vmatpush2.msra.mxu0 0.0
    %1622 = vmatprep.subr.mxu0 0.0
    %1623 = vmatpush2.msra.mxu0 0.0
    %1624 = vmatprep.subr.mxu0 0.0
    %1625 = vmatpush2.msra.mxu0 0.0
    %1626 = vmatprep.subr.mxu0 0.0
    %1627 = vmatpush2.msra.mxu0 0.0
    %1628 = vmatprep.subr.mxu0 0.0
    %1629 = vmatpush2.msra.mxu0 0.0
    %1630 = vmatprep.subr.mxu0 0.0
    %1631 = vmatpush2.msra.mxu0 0.0
    %1632 = vmatprep.subr.mxu0 0.0
    %1633 = vmatpush2.msra.mxu0 0.0
    %1634 = vmatprep.subr.mxu0 0.0
    %1635 = vmatpush2.msra.mxu0 0.0
    %1636 = vmatprep.subr.mxu0 0.0
    %1637 = vmatpush2.msra.mxu0 0.0
    %1638 = vmatprep.subr.mxu0 0.0
    %1639 = vmatpush2.msra.mxu0 0.0
    %1640 = vmatprep.mubr.f32.mxu0 0.0
    %1641 = vmatmul.mubr.f32.gmra.mxu0 %v1571
    %v1642 = vpop.f32.mrf.mxu0
    %v1643 = vadd.f32 %v1569, %v1642
    %v1644 = vpop.f32.mrf.mxu0
    %1645 = vmatprep.mubr.f32.mxu0 0.0
    %1646 = vmatmul.mubr.f32.gmra.mxu0 %v1574
    %v1647 = vpop.f32.mrf.mxu0
    %v1648 = vadd.f32 %v1569, %v1647
    %v1649 = vpop.f32.mrf.mxu0
    %1650 = vdwg.mxu0
    %1651 = vrot.lane.b32.xlu0 %v85, 32
    %v1652 = vpop.permute.xlu0 %1651
    %1653 = vrot.lane.b32.xlu0 %v86, 32
    %v1654 = vpop.permute.xlu0 %1653
    %v1657 = vsel %vm99, %v1643, %v1652
    %v1658 = vsel %vm99, %v1648, %v1654
    %v1659 = vld [vmem:[%s4] sm:$0xff]
    %v1660 = vld [vmem:[%s4 + $0x8] sm:$0xff]
    %v1661 = vld [vmem:[%s4 + $0x10] sm:$0xff]
    %v1662 = vld [vmem:[%s4 + $0x18] sm:$0xff]
    %v1663 = vld [vmem:[%s4 + $0x20] sm:$0xff]
    %v1664 = vld [vmem:[%s4 + $0x28] sm:$0xff]
    %v1665 = vld [vmem:[%s4 + $0x30] sm:$0xff]
    %v1666 = vld [vmem:[%s4 + $0x38] sm:$0xff]
    %v1667 = vlaneseq
    %v1668 = vshrl.u32 %v1667, 7
    %v1669 = vsub.s32 2, %v1668
    %v1670 = vrot.slane %v89, %v1669
    %vm1671 = vcmask 523264
    %v1673 = vsel %vm1671, %v1657, 0
    %v1676 = vsel %vm1671, %v1658, 0
    %1678 = vmatprep.subr.mxu0 0.0
    %1679 = vmatpush1.msra.mxu0 0.0
    %1680 = vmatprep.subr.mxu0 0.0
    %1681 = vmatpush1.msra.mxu0 0.0
    %1682 = vmatprep.subr.mxu0 0.0
    %1683 = vmatpush1.msra.mxu0 0.0
    %1684 = vmatprep.subr.mxu0 0.0
    %1685 = vmatpush1.msra.mxu0 0.0
    %1686 = vmatprep.subr.mxu0 0.0
    %1687 = vmatpush1.msra.mxu0 0.0
    %1688 = vmatprep.subr.mxu0 0.0
    %1689 = vmatpush1.msra.mxu0 0.0
    %1690 = vmatprep.subr.mxu0 0.0
    %1691 = vmatpush1.msra.mxu0 0.0
    %1692 = vmatprep.subr.mxu0 0.0
    %1693 = vmatpush1.msra.mxu0 0.0
    %1694 = vmatprep.subr.mxu0 0.0
    %1695 = vmatpush1.msra.mxu0 %v1666
    %1696 = vmatprep.subr.mxu0 0.0
    %1697 = vmatpush1.msra.mxu0 %v1665
    %1698 = vmatprep.subr.mxu0 0.0
    %1699 = vmatpush1.msra.mxu0 %v1664
    %1700 = vmatprep.subr.mxu0 0.0
    %1701 = vmatpush1.msra.mxu0 %v1663
    %1702 = vmatprep.subr.mxu0 0.0
    %1703 = vmatpush1.msra.mxu0 %v1662
    %1704 = vmatprep.subr.mxu0 0.0
    %1705 = vmatpush1.msra.mxu0 %v1661
    %1706 = vmatprep.subr.mxu0 0.0
    %1707 = vmatpush1.msra.mxu0 %v1660
    %1708 = vmatprep.subr.mxu0 0.0
    %1709 = vmatpush1.msra.mxu0 %v1659
    %1710 = vmatprep.subr.mxu0 0.0
    %1711 = vmatpush2.msra.mxu0 0.0
    %1712 = vmatprep.subr.mxu0 0.0
    %1713 = vmatpush2.msra.mxu0 0.0
    %1714 = vmatprep.subr.mxu0 0.0
    %1715 = vmatpush2.msra.mxu0 0.0
    %1716 = vmatprep.subr.mxu0 0.0
    %1717 = vmatpush2.msra.mxu0 0.0
    %1718 = vmatprep.subr.mxu0 0.0
    %1719 = vmatpush2.msra.mxu0 0.0
    %1720 = vmatprep.subr.mxu0 0.0
    %1721 = vmatpush2.msra.mxu0 0.0
    %1722 = vmatprep.subr.mxu0 0.0
    %1723 = vmatpush2.msra.mxu0 0.0
    %1724 = vmatprep.subr.mxu0 0.0
    %1725 = vmatpush2.msra.mxu0 0.0
    %1726 = vmatprep.subr.mxu0 0.0
    %1727 = vmatpush2.msra.mxu0 0.0
    %1728 = vmatprep.subr.mxu0 0.0
    %1729 = vmatpush2.msra.mxu0 0.0
    %1730 = vmatprep.subr.mxu0 0.0
    %1731 = vmatpush2.msra.mxu0 0.0
    %1732 = vmatprep.subr.mxu0 0.0
    %1733 = vmatpush2.msra.mxu0 0.0
    %1734 = vmatprep.subr.mxu0 0.0
    %1735 = vmatpush2.msra.mxu0 0.0
    %1736 = vmatprep.subr.mxu0 0.0
    %1737 = vmatpush2.msra.mxu0 0.0
    %1738 = vmatprep.subr.mxu0 0.0
    %1739 = vmatpush2.msra.mxu0 0.0
    %1740 = vmatprep.subr.mxu0 0.0
    %1741 = vmatpush2.msra.mxu0 0.0
    %1742 = vmatprep.mubr.f32.mxu0 0.0
    %1743 = vmatmul.mubr.f32.gmra.mxu0 %v1673
    %v1744 = vpop.f32.mrf.mxu0
    %v1745 = vadd.f32 %v1670, %v1744
    %v1746 = vpop.f32.mrf.mxu0
    %1747 = vmatprep.mubr.f32.mxu0 0.0
    %1748 = vmatmul.mubr.f32.gmra.mxu0 %v1676
    %v1749 = vpop.f32.mrf.mxu0
    %v1750 = vadd.f32 %v1670, %v1749
    %v1751 = vpop.f32.mrf.mxu0
    %1752 = vdwg.mxu0
    %v1753 = vxor.u32 %v1745, 2147483648
    %v1754 = vxor.u32 %v1750, 2147483648
    %v1755 = vmul.f32 %v1753, 1.442695
    %v1756 = vpow.pop %v1755
    %v1757 = vmul.f32 %v1754, 1.442695
    %v1758 = vpow.pop %v1757
    %v1759 = vadd.f32 %v1756, 1.0
    %v1760 = vadd.f32 %v1758, 1.0
    %v1761 = vrcp.pop %v1759
    %v1762 = vmul.f32 1.0, %v1761
    %v1763 = vrcp.pop %v1760
    %v1764 = vmul.f32 1.0, %v1763
    %1767 = vrot.lane.b32.xlu0 %v1745, 96
    %v1768 = vpop.permute.xlu0 %1767
    %1769 = vrot.lane.b32.xlu0 %v1750, 96
    %v1770 = vpop.permute.xlu0 %1769
    %v1773 = vmul.f32 %v1762, %v1768
    %v1774 = vmul.f32 %v1764, %v1770
    %v1775 = vadd.f32 %v85, %v1773
    %v1776 = vadd.f32 %v86, %v1774
    %v1777 = vsel %vm99, %v1775, 0.0
    %1778 = vadd.xlane.f32.xlu0 %v1777
    %v1779 = vpop.xlane.xlu0 %1778
    %v1780 = vsel %vm99, %v1776, 0.0
    %1781 = vadd.xlane.f32.xlu0 %v1780
    %v1782 = vpop.xlane.xlu0 %1781
    %v1783 = vrcp.pop 32.0
    %v1784 = vmul.f32 %v1779, %v1783
    %v1785 = vmul.f32 %v1782, %v1783
    %v1786 = vsub.f32 %v1775, %v1784
    %v1787 = vsub.f32 %v1776, %v1785
    %v1788 = vmul.f32 %v1786, %v1786
    %v1789 = vmul.f32 %v1787, %v1787
    %v1790 = vsel %vm99, %v1788, 0.0
    %1791 = vadd.xlane.f32.xlu0 %v1790
    %v1792 = vpop.xlane.xlu0 %1791
    %v1793 = vsel %vm99, %v1789, 0.0
    %1794 = vadd.xlane.f32.xlu0 %v1793
    %v1795 = vpop.xlane.xlu0 %1794
    %v1796 = vmul.f32 %v1792, %v1783
    %v1797 = vmul.f32 %v1795, %v1783
    %v1798 = vadd.f32 %v1796, 1e-05
    %v1799 = vadd.f32 %v1797, 1e-05
    %v1800 = vrsqrt.pop %v1798
    %v1801 = vrsqrt.pop %v1799
    %v1802 = vmul.f32 %v1786, %v1800
    %v1803 = vmul.f32 %v1787, %v1801
    %v1804 = vlaneseq
    %v1805 = vshrl.u32 %v1804, 7
    %v1806 = vsub.s32 3, %v1805
    %v1807 = vrot.slane %v89, %v1806
    %v1808 = vmul.f32 %v1802, %v1807
    %v1809 = vmul.f32 %v1803, %v1807
    %v1810 = vlaneseq
    %v1811 = vshrl.u32 %v1810, 7
    %v1812 = vsub.s32 4, %v1811
    %v1813 = vrot.slane %v89, %v1812
    %v1814 = vadd.f32 %v1808, %v1813
    %v1815 = vadd.f32 %v1809, %v1813
    %v1816 = vld [vmem:[#allocation7] sm:$0xff]
    %v1817 = vld [vmem:[#allocation7 + $0x8] sm:$0xff]
    %v1818 = vld [vmem:[#allocation7 + $0x10] sm:$0xff]
    %v1819 = vld [vmem:[#allocation7 + $0x18] sm:$0xff]
    %v1820 = vlaneseq
    %v1821 = vshrl.u32 %v1820, 7
    %v1822 = vsub.s32 5, %v1821
    %v1823 = vrot.slane %v89, %v1822
    %v1825 = vsel %vm99, %v1814, 0
    %v1828 = vsel %vm99, %v1815, 0
    %1830 = vmatprep.subr.mxu0 0.0
    %1831 = vmatpush1.msra.mxu0 0.0
    %1832 = vmatprep.subr.mxu0 0.0
    %1833 = vmatpush1.msra.mxu0 0.0
    %1834 = vmatprep.subr.mxu0 0.0
    %1835 = vmatpush1.msra.mxu0 0.0
    %1836 = vmatprep.subr.mxu0 0.0
    %1837 = vmatpush1.msra.mxu0 0.0
    %1838 = vmatprep.subr.mxu0 0.0
    %1839 = vmatpush1.msra.mxu0 0.0
    %1840 = vmatprep.subr.mxu0 0.0
    %1841 = vmatpush1.msra.mxu0 0.0
    %1842 = vmatprep.subr.mxu0 0.0
    %1843 = vmatpush1.msra.mxu0 0.0
    %1844 = vmatprep.subr.mxu0 0.0
    %1845 = vmatpush1.msra.mxu0 0.0
    %1846 = vmatprep.subr.mxu0 0.0
    %1847 = vmatpush1.msra.mxu0 0.0
    %1848 = vmatprep.subr.mxu0 0.0
    %1849 = vmatpush1.msra.mxu0 0.0
    %1850 = vmatprep.subr.mxu0 0.0
    %1851 = vmatpush1.msra.mxu0 0.0
    %1852 = vmatprep.subr.mxu0 0.0
    %1853 = vmatpush1.msra.mxu0 0.0
    %1854 = vmatprep.subr.mxu0 0.0
    %1855 = vmatpush1.msra.mxu0 %v1819
    %1856 = vmatprep.subr.mxu0 0.0
    %1857 = vmatpush1.msra.mxu0 %v1818
    %1858 = vmatprep.subr.mxu0 0.0
    %1859 = vmatpush1.msra.mxu0 %v1817
    %1860 = vmatprep.subr.mxu0 0.0
    %1861 = vmatpush1.msra.mxu0 %v1816
    %1862 = vmatprep.subr.mxu0 0.0
    %1863 = vmatpush2.msra.mxu0 0.0
    %1864 = vmatprep.subr.mxu0 0.0
    %1865 = vmatpush2.msra.mxu0 0.0
    %1866 = vmatprep.subr.mxu0 0.0
    %1867 = vmatpush2.msra.mxu0 0.0
    %1868 = vmatprep.subr.mxu0 0.0
    %1869 = vmatpush2.msra.mxu0 0.0
    %1870 = vmatprep.subr.mxu0 0.0
    %1871 = vmatpush2.msra.mxu0 0.0
    %1872 = vmatprep.subr.mxu0 0.0
    %1873 = vmatpush2.msra.mxu0 0.0
    %1874 = vmatprep.subr.mxu0 0.0
    %1875 = vmatpush2.msra.mxu0 0.0
    %1876 = vmatprep.subr.mxu0 0.0
    %1877 = vmatpush2.msra.mxu0 0.0
    %1878 = vmatprep.subr.mxu0 0.0
    %1879 = vmatpush2.msra.mxu0 0.0
    %1880 = vmatprep.subr.mxu0 0.0
    %1881 = vmatpush2.msra.mxu0 0.0
    %1882 = vmatprep.subr.mxu0 0.0
    %1883 = vmatpush2.msra.mxu0 0.0
    %1884 = vmatprep.subr.mxu0 0.0
    %1885 = vmatpush2.msra.mxu0 0.0
    %1886 = vmatprep.subr.mxu0 0.0
    %1887 = vmatpush2.msra.mxu0 0.0
    %1888 = vmatprep.subr.mxu0 0.0
    %1889 = vmatpush2.msra.mxu0 0.0
    %1890 = vmatprep.subr.mxu0 0.0
    %1891 = vmatpush2.msra.mxu0 0.0
    %1892 = vmatprep.subr.mxu0 0.0
    %1893 = vmatpush2.msra.mxu0 0.0
    %1894 = vmatprep.mubr.f32.mxu0 0.0
    %1895 = vmatmul.mubr.f32.gmra.mxu0 %v1825
    %v1896 = vpop.f32.mrf.mxu0
    %v1897 = vadd.f32 %v1823, %v1896
    %v1898 = vpop.f32.mrf.mxu0
    %1899 = vmatprep.mubr.f32.mxu0 0.0
    %1900 = vmatmul.mubr.f32.gmra.mxu0 %v1828
    %v1901 = vpop.f32.mrf.mxu0
    %v1902 = vadd.f32 %v1823, %v1901
    %v1903 = vpop.f32.mrf.mxu0
    %1904 = vdwg.mxu0
    %v1905 = vmax.f32 %v1897, 0.0
    %v1906 = vmax.f32 %v1902, 0.0
    %v1907 = vld [vmem:[%s6] sm:$0xff]
    %v1908 = vld [vmem:[%s6 + $0x8] sm:$0xff]
    %v1909 = vld [vmem:[%s6 + $0x10] sm:$0xff]
    %v1910 = vld [vmem:[%s6 + $0x18] sm:$0xff]
    %v1911 = vld [vmem:[%s6 + $0x20] sm:$0xff]
    %v1912 = vld [vmem:[%s6 + $0x28] sm:$0xff]
    %v1913 = vld [vmem:[%s6 + $0x30] sm:$0xff]
    %v1914 = vld [vmem:[%s6 + $0x38] sm:$0xff]
    %v1915 = vlaneseq
    %v1916 = vshrl.u32 %v1915, 7
    %v1917 = vsub.s32 6, %v1916
    %v1918 = vrot.slane %v89, %v1917
    %v1920 = vsel %vm1671, %v1905, 0
    %v1923 = vsel %vm1671, %v1906, 0
    %1925 = vmatprep.subr.mxu0 0.0
    %1926 = vmatpush1.msra.mxu0 0.0
    %1927 = vmatprep.subr.mxu0 0.0
    %1928 = vmatpush1.msra.mxu0 0.0
    %1929 = vmatprep.subr.mxu0 0.0
    %1930 = vmatpush1.msra.mxu0 0.0
    %1931 = vmatprep.subr.mxu0 0.0
    %1932 = vmatpush1.msra.mxu0 0.0
    %1933 = vmatprep.subr.mxu0 0.0
    %1934 = vmatpush1.msra.mxu0 0.0
    %1935 = vmatprep.subr.mxu0 0.0
    %1936 = vmatpush1.msra.mxu0 0.0
    %1937 = vmatprep.subr.mxu0 0.0
    %1938 = vmatpush1.msra.mxu0 0.0
    %1939 = vmatprep.subr.mxu0 0.0
    %1940 = vmatpush1.msra.mxu0 0.0
    %1941 = vmatprep.subr.mxu0 0.0
    %1942 = vmatpush1.msra.mxu0 %v1914
    %1943 = vmatprep.subr.mxu0 0.0
    %1944 = vmatpush1.msra.mxu0 %v1913
    %1945 = vmatprep.subr.mxu0 0.0
    %1946 = vmatpush1.msra.mxu0 %v1912
    %1947 = vmatprep.subr.mxu0 0.0
    %1948 = vmatpush1.msra.mxu0 %v1911
    %1949 = vmatprep.subr.mxu0 0.0
    %1950 = vmatpush1.msra.mxu0 %v1910
    %1951 = vmatprep.subr.mxu0 0.0
    %1952 = vmatpush1.msra.mxu0 %v1909
    %1953 = vmatprep.subr.mxu0 0.0
    %1954 = vmatpush1.msra.mxu0 %v1908
    %1955 = vmatprep.subr.mxu0 0.0
    %1956 = vmatpush1.msra.mxu0 %v1907
    %1957 = vmatprep.subr.mxu0 0.0
    %1958 = vmatpush2.msra.mxu0 0.0
    %1959 = vmatprep.subr.mxu0 0.0
    %1960 = vmatpush2.msra.mxu0 0.0
    %1961 = vmatprep.subr.mxu0 0.0
    %1962 = vmatpush2.msra.mxu0 0.0
    %1963 = vmatprep.subr.mxu0 0.0
    %1964 = vmatpush2.msra.mxu0 0.0
    %1965 = vmatprep.subr.mxu0 0.0
    %1966 = vmatpush2.msra.mxu0 0.0
    %1967 = vmatprep.subr.mxu0 0.0
    %1968 = vmatpush2.msra.mxu0 0.0
    %1969 = vmatprep.subr.mxu0 0.0
    %1970 = vmatpush2.msra.mxu0 0.0
    %1971 = vmatprep.subr.mxu0 0.0
    %1972 = vmatpush2.msra.mxu0 0.0
    %1973 = vmatprep.subr.mxu0 0.0
    %1974 = vmatpush2.msra.mxu0 0.0
    %1975 = vmatprep.subr.mxu0 0.0
    %1976 = vmatpush2.msra.mxu0 0.0
    %1977 = vmatprep.subr.mxu0 0.0
    %1978 = vmatpush2.msra.mxu0 0.0
    %1979 = vmatprep.subr.mxu0 0.0
    %1980 = vmatpush2.msra.mxu0 0.0
    %1981 = vmatprep.subr.mxu0 0.0
    %1982 = vmatpush2.msra.mxu0 0.0
    %1983 = vmatprep.subr.mxu0 0.0
    %1984 = vmatpush2.msra.mxu0 0.0
    %1985 = vmatprep.subr.mxu0 0.0
    %1986 = vmatpush2.msra.mxu0 0.0
    %1987 = vmatprep.subr.mxu0 0.0
    %1988 = vmatpush2.msra.mxu0 0.0
    %1989 = vmatprep.mubr.f32.mxu0 0.0
    %1990 = vmatmul.mubr.f32.gmra.mxu0 %v1920
    %v1991 = vpop.f32.mrf.mxu0
    %v1992 = vadd.f32 %v1918, %v1991
    %v1993 = vpop.f32.mrf.mxu0
    %1994 = vmatprep.mubr.f32.mxu0 0.0
    %1995 = vmatmul.mubr.f32.gmra.mxu0 %v1923
    %v1996 = vpop.f32.mrf.mxu0
    %v1997 = vadd.f32 %v1918, %v1996
    %v1998 = vpop.f32.mrf.mxu0
    %1999 = vdwg.mxu0
    %v2000 = vmax.f32 %v1992, 0.0
    %v2001 = vmax.f32 %v1997, 0.0
    %v2002 = vadd.f32 %v1814, %v2000
    %v2003 = vadd.f32 %v1815, %v2001
    %v2004 = vsel %vm99, %v2002, 0.0
    %2005 = vadd.xlane.f32.xlu0 %v2004
    %v2006 = vpop.xlane.xlu0 %2005
    %v2007 = vsel %vm99, %v2003, 0.0
    %2008 = vadd.xlane.f32.xlu0 %v2007
    %v2009 = vpop.xlane.xlu0 %2008
    %v2010 = vmul.f32 %v2006, %v1783
    %v2011 = vmul.f32 %v2009, %v1783
    %v2012 = vsub.f32 %v2002, %v2010
    %v2013 = vsub.f32 %v2003, %v2011
    %v2014 = vmul.f32 %v2012, %v2012
    %v2015 = vmul.f32 %v2013, %v2013
    %v2016 = vsel %vm99, %v2014, 0.0
    %2017 = vadd.xlane.f32.xlu0 %v2016
    %v2018 = vpop.xlane.xlu0 %2017
    %v2019 = vsel %vm99, %v2015, 0.0
    %2020 = vadd.xlane.f32.xlu0 %v2019
    %v2021 = vpop.xlane.xlu0 %2020
    %v2022 = vmul.f32 %v2018, %v1783
    %v2023 = vmul.f32 %v2021, %v1783
    %v2024 = vadd.f32 %v2022, 1e-05
    %v2025 = vadd.f32 %v2023, 1e-05
    %v2026 = vrsqrt.pop %v2024
    %v2027 = vrsqrt.pop %v2025
    %v2028 = vmul.f32 %v2012, %v2026
    %v2029 = vmul.f32 %v2013, %v2027
    %v2030 = vlaneseq
    %v2031 = vshrl.u32 %v2030, 7
    %v2032 = vsub.s32 7, %v2031
    %v2033 = vrot.slane %v89, %v2032
    %v2034 = vmul.f32 %v2028, %v2033
    %v2035 = vmul.f32 %v2029, %v2033
    %v2036 = vlaneseq
    %v2037 = vshrl.u32 %v2036, 7
    %v2038 = vsub.s32 0, %v2037
    %v2039 = vrot.slane %v90, %v2038
    %v2040 = vadd.f32 %v2034, %v2039
    %v2041 = vadd.f32 %v2035, %v2039
    %2042 = vst.msk [vmem:[#allocation10] sm:$0xff] %vm99, %v2040
    %2043 = vst.msk [vmem:[#allocation10 + $0x8] sm:$0xff] %vm99, %v2041
    // Predicated region
    $region50: #{tpu_custom_call.1} parent=1 // pred_check
      _
    $region51: #{tpu_custom_call.1} parent=1 // pred_check_branch
      %2045 = sbr.rel (0) target = $region53
    $region52: #{tpu_custom_call.1} parent=1 // pred_region
      %s2047 = ssub.s32 256, 256
      %2048 = vsyncadd [#allocation4], %s2047
      %s2049 = sshll.u32 [#allocation10], 4
      %s2050 = int_to_ptr.vmem [resolvable:$true] %s2049
      %2055 = dma.vmem_to_hbm [thread:$0]  %s2050, 256, %s8, [#allocation4], 128, 128, 8
    $region53: #{tpu_custom_call.1} parent=1 // pred_fallthru
      _
    // Predicated region
    $region54: #{tpu_custom_call.1} parent=1 // pred_check
      _
    $region55: #{tpu_custom_call.1} parent=1 // pred_check_branch
      %2057 = sbr.rel (0) target = $region57
    $region56: #{tpu_custom_call.1} parent=1 // pred_region
      %2058 = dma.done [#allocation4], 256
    $region57: #{tpu_custom_call.1} parent=1 // pred_fallthru
      _
    %2059 = vsyncpa [#allocation3], 1
    %2060 = vsyncpa [#allocation6], 1
    %2061 = vsyncpa [#allocation9], 1
    %2062 = vsyncpa [#allocation4], 1

</llo_original>
